<compile_context>
chip_gen: v5e
topology: v5e:2x2
jax: 0.10.0
libtpu: 0.0.40
codegen_flags: <defaults>
</compile_context>

<pallas_src>
import functools

import jax
import jax.numpy as jnp
from jax import lax
from jax.experimental import pallas as pl
from jax.experimental.pallas import tpu as pltpu


_MAX_TM = 256            # rows/tile for row-tiled linear kernels (mult. of 8)
_LN_EPS = 1e-5
_SQRT_2_OVER_PI = 0.7978845608028654


# ----------------------------------------------------------------------------
# In-kernel helpers
# ----------------------------------------------------------------------------
def _gelu_tanh(h):
    # tanh-form GELU (== jax.nn.gelu approximate=True); tanh lands on the EUP slot,
    # ~1e-3 max deviation from PyTorch's exact-erf nn.GELU().
    return 0.5 * h * (1.0 + jnp.tanh(_SQRT_2_OVER_PI * (h + 0.044715 * h * h * h)))


# ----------------------------------------------------------------------------
# Pallas kernels
# ----------------------------------------------------------------------------
def _matmul_kernel(x_ref, w_ref, o_ref):
    # y = x @ W (bias-free), bf16 operands, f32 accumulation.
    o_ref[...] = jnp.dot(x_ref[...].astype(jnp.bfloat16), w_ref[...],
                         preferred_element_type=jnp.float32).astype(o_ref.dtype)


def _matmul_gated_kernel(x_ref, m_ref, w_ref, o_ref):
    # y = (x * correct_m) @ W — fuses the Projector gate into the first qv matmul.
    xg = (x_ref[...] * m_ref[...]).astype(jnp.bfloat16)
    o_ref[...] = jnp.dot(xg, w_ref[...],
                         preferred_element_type=jnp.float32).astype(o_ref.dtype)


def _mlp_kernel(x_ref, w1_ref, b1_ref, w2_ref, b2_ref, o_ref):
    # Projector.encoder = Mlp(D, D//4, D//8, GELU): fc1 -> GELU -> fc2
    h = jnp.dot(x_ref[...].astype(jnp.bfloat16), w1_ref[...],
                preferred_element_type=jnp.float32) + b1_ref[...]
    h = _gelu_tanh(h)
    o_ref[...] = jnp.dot(h.astype(jnp.bfloat16), w2_ref[...],
                         preferred_element_type=jnp.float32) + b2_ref[...]


def _proj_ln_kernel(x_ref, w_ref, b_ref, g_ref, beta_ref, o_ref, *, eps):
    # Diffuser: norm(proj(x))  (LayerNorm, biased variance, eps=1e-5)
    y = jnp.dot(x_ref[...].astype(jnp.bfloat16), w_ref[...],
                preferred_element_type=jnp.float32) + b_ref[...]
    mu = jnp.mean(y, axis=-1, keepdims=True)
    var = jnp.mean((y - mu) ** 2, axis=-1, keepdims=True)
    o_ref[...] = (y - mu) * lax.rsqrt(var + eps) * g_ref[...] + beta_ref[...]


def _mix_encode_kernel(x_ref, c_ref, m_ref, w1_ref, b1_ref, w2_ref, b2_ref,
                       xo_ref, e_ref):
    # Fused tail:  x_out = m*corrected + (1-m)*x ; embed = encoder(x_out)
    m = m_ref[...]
    x_out = m * c_ref[...] + (1.0 - m) * x_ref[...]
    xo_ref[...] = x_out
    h = jnp.dot(x_out.astype(jnp.bfloat16), w1_ref[...],
                preferred_element_type=jnp.float32) + b1_ref[...]
    h = _gelu_tanh(h)
    e_ref[...] = jnp.dot(h.astype(jnp.bfloat16), w2_ref[...],
                         preferred_element_type=jnp.float32) + b2_ref[...]


def _cos_gate_kernel(x_ref, r_ref, o_ref, *, nb_ref, tau):
    # correct_m = 0.5 + 0.5*tanh(25*((mean_r cos(x_enc, ref_enc_r) + 1)/2 - tau))
    # torch.cosine_similarity clamps the *product* of norms with eps (matched here).
    x = x_ref[...]                                        # (B, N, D8)
    nx = jnp.sqrt(jnp.sum(x * x, axis=-1))                # (B, N)
    acc = jnp.zeros(nx.shape, jnp.float32)
    for r in range(nb_ref):                               # static unroll, nb_ref small
        rr = r_ref[r]                                     # (N, D8)
        nr = jnp.sqrt(jnp.sum(rr * rr, axis=-1))          # (N,)
        dots = jnp.sum(x * rr[None, :, :], axis=-1)       # (B, N)
        acc = acc + dots / jnp.maximum(nx * nr[None, :], 1e-8)
    m = (acc / nb_ref + 1.0) * 0.5
    o_ref[...] = 0.5 + 0.5 * jnp.tanh(25.0 * (m - tau))


def _attn_kernel(qv_ref, k_ref, o_ref, *, num_heads, head_dim, nb_ref):
    # One batch element of the Diffuser cross-attention, all refs in one body:
    #   per (r, h):  a = (q_h @ k_rh^T) ; a2 = a @ a^T ; acc_h += a2 @ v_h
    # The attention scale and the 1/R mean over refs are pre-folded into the q-half
    # of the qv weight (output ∝ scale^2, so (s/sqrt(R))^2 == s^2/R exactly).
    # Heads are lane slices of the natural qv/k matmul layouts (no HBM transposes);
    # ref/head loops are static unrolls (R, H small) so the LLO scheduler sees the
    # whole MXU chain.
    d = num_heads * head_dim
    for h in range(num_heads):
        qh = qv_ref[0, :, pl.ds(h * head_dim, head_dim)]                   # (N, Dh)
        vh = qv_ref[0, :, pl.ds(d + h * head_dim, head_dim)]               # (N, Dh)
        acc = jnp.zeros((qh.shape[0], head_dim), jnp.float32)
        for r in range(nb_ref):
            kh = k_ref[r, :, pl.ds(h * head_dim, head_dim)]                # (N, Dh)
            # contract last axes of both operands directly — no explicit .T (XLU)
            a = lax.dot_general(qh, kh, (((1,), (1,)), ((), ())),
                                preferred_element_type=jnp.float32)        # (N, N)
            ab = a.astype(jnp.bfloat16)
            a2 = lax.dot_general(ab, ab, (((1,), (1,)), ((), ())),
                                 preferred_element_type=jnp.float32)       # (N, N)
            acc = acc + jnp.dot(a2.astype(jnp.bfloat16), vh,
                                preferred_element_type=jnp.float32)        # (N, Dh)
        o_ref[0, h] = acc


# ----------------------------------------------------------------------------
# Wrappers
# ----------------------------------------------------------------------------
def _row_tiled_call(kernel, row_args, full_args, out_cols_dtypes):
    """Row-tiled pallas_call: row_args are (M, cols) arrays tiled over M; full_args
    (weights/biases) are passed as whole resident blocks; outputs are (M, cols)."""
    m = row_args[0].shape[0]
    tm = m if m <= _MAX_TM else _MAX_TM
    grid = (pl.cdiv(m, tm),)

    in_specs = []
    for a in row_args:
        in_specs.append(pl.BlockSpec((tm, a.shape[1]), lambda i: (i, 0)))
    for a in full_args:
        in_specs.append(pl.BlockSpec(a.shape, lambda i, nd=a.ndim: (0,) * nd))

    out_specs = tuple(pl.BlockSpec((tm, c), lambda i: (i, 0))
                      for c, _ in out_cols_dtypes)
    out_shape = tuple(jax.ShapeDtypeStruct((m, c), dt) for c, dt in out_cols_dtypes)
    if len(out_shape) == 1:
        out_specs, out_shape = out_specs[0], out_shape[0]

    return pl.pallas_call(
        kernel,
        grid=grid,
        in_specs=in_specs,
        out_specs=out_specs,
        out_shape=out_shape,
        compiler_params=pltpu.CompilerParams(dimension_semantics=("parallel",)),
    )(*row_args, *full_args)


def matmul(x2d, w_bf16, out_dtype=jnp.float32):
    return _row_tiled_call(_matmul_kernel, [x2d], [w_bf16],
                           [(w_bf16.shape[1], out_dtype)])


def matmul_gated(x2d, m2, w_bf16, out_dtype=jnp.bfloat16):
    return _row_tiled_call(_matmul_gated_kernel, [x2d, m2], [w_bf16],
                           [(w_bf16.shape[1], out_dtype)])


def mlp_encode(x2d, w1, b1, w2, b2):
    return _row_tiled_call(_mlp_kernel, [x2d], [w1, b1, w2, b2],
                           [(w2.shape[1], jnp.float32)])


def proj_ln(x2d, w, b, g, beta):
    kern = functools.partial(_proj_ln_kernel, eps=_LN_EPS)
    return _row_tiled_call(kern, [x2d], [w, b, g, beta],
                           [(x2d.shape[1], jnp.float32)])


def mix_encode(x2d, c2d, m2, w1, b1, w2, b2):
    return _row_tiled_call(_mix_encode_kernel, [x2d, c2d, m2], [w1, b1, w2, b2],
                           [(x2d.shape[1], jnp.float32), (w2.shape[1], jnp.float32)])


def cos_gate(x_enc, ref_enc, *, nb_ref, tau):
    b, n, _ = x_enc.shape
    kern = functools.partial(_cos_gate_kernel, nb_ref=nb_ref, tau=tau)
    return pl.pallas_call(
        kern,
        out_shape=jax.ShapeDtypeStruct((b, n), jnp.float32),
    )(x_enc, ref_enc)


def attention_mean_over_refs(qv, k, *, num_heads, head_dim):
    # qv: (B, N, 2D) bf16 (q columns pre-scaled by scale/sqrt(R)) ;
    # k: (R, N, D) bf16 -> (B, H, N, Dh) f32 (mean over refs already folded into q).
    b, n, two_d = qv.shape
    d = two_d // 2
    r = k.shape[0]
    kern = functools.partial(_attn_kernel, num_heads=num_heads, head_dim=head_dim,
                             nb_ref=r)
    return pl.pallas_call(
        kern,
        out_shape=jax.ShapeDtypeStruct((b, num_heads, n, head_dim), jnp.float32),
        grid=(b,),
        in_specs=[
            pl.BlockSpec((1, n, two_d), lambda bi: (bi, 0, 0)),   # qv (per batch)
            pl.BlockSpec((r, n, d), lambda bi: (0, 0, 0)),        # k  (fully resident)
        ],
        out_specs=pl.BlockSpec((1, num_heads, n, head_dim),
                               lambda bi: (bi, 0, 0, 0)),
        compiler_params=pltpu.CompilerParams(dimension_semantics=("parallel",)),
    )(qv, k)


# ----------------------------------------------------------------------------
# TrustDiffuserModule / TrustDiffuserNet forward
# ----------------------------------------------------------------------------
def trust_diffuser_module(tokens, params, *, nb_ref, num_heads,
                          diffusion_steps=3, tau=0.5, last_layer=False):
    x = tokens[:-nb_ref]                           # (B, N, D)
    ref = lax.stop_gradient(tokens[-nb_ref:])      # (R, N, D)   (ref.detach())
    B, N, D = x.shape
    R, H = nb_ref, num_heads
    Dh = D // H
    D8 = params["enc_w2"].shape[1]
    # Attention output is quadratic in the scale applied to q, so folding
    # scale/sqrt(R) into the q columns gives scale^2/R == "mean over refs" exactly.
    scale_eff = (Dh ** -0.5) / (R ** 0.5)

    # One-time bf16 copies of matmul weights (halves weight DMA, feeds MXU bf16 path)
    qv_w_f32 = params["qv_w"]
    qv_w = jnp.concatenate([qv_w_f32[:, :D] * scale_eff, qv_w_f32[:, D:]],
                           axis=1).astype(jnp.bfloat16)
    k_w = params["k_w"].astype(jnp.bfloat16)
    proj_w = params["proj_w"].astype(jnp.bfloat16)
    enc_w1 = params["enc_w1"].astype(jnp.bfloat16)
    enc_w2 = params["enc_w2"].astype(jnp.bfloat16)
    enc_b1, enc_b2 = params["enc_b1"], params["enc_b2"]

    x2 = x.reshape(B * N, D)
    ref2 = ref.reshape(R * N, D)

    # ---------------- Projector ----------------
    x_enc = mlp_encode(x2, enc_w1, enc_b1, enc_w2, enc_b2).reshape(B, N, D8)
    ref_enc = mlp_encode(ref2, enc_w1, enc_b1, enc_w2, enc_b2).reshape(R, N, D8)
    correct_m = cos_gate(x_enc, ref_enc, nb_ref=R, tau=tau)        # (B, N)
    m2 = correct_m.reshape(B * N, 1)

    # ---------------- Diffuser(x * correct_m, ref) ----------------
    # k projection does not depend on the diffusion state: hoist out of the loop.
    k = matmul(ref2, k_w, out_dtype=jnp.bfloat16).reshape(R, N, D)

    xd2 = x2
    for step in range(diffusion_steps):
        if step == 0:
            qv = matmul_gated(xd2, m2, qv_w, out_dtype=jnp.bfloat16)   # fuses x*m
        else:
            qv = matmul(xd2, qv_w, out_dtype=jnp.bfloat16)
        qv = qv.reshape(B, N, 2 * D)                                   # view only
        o_mean = attention_mean_over_refs(qv, k, num_heads=H, head_dim=Dh)  # (B,H,N,Dh)
        # Raw row-major flatten (H,N,Dh)->(N,C) per batch mirrors the PyTorch
        # `.reshape(B, nb_ref, N, C)` (mean over refs commutes) — metadata only.
        xd2 = proj_ln(o_mean.reshape(B * N, D), proj_w, params["proj_b"],
                      params["ln_g"], params["ln_b"])
    corrected2 = xd2

    # x = correct_m * corrected + (1 - correct_m) * x ; embed = encoder(x)  (fused)
    x_out2, embed2 = mix_encode(x2, corrected2, m2, enc_w1, enc_b1, enc_w2, enc_b2)
    x_out = x_out2.reshape(B, N, D)
    embed_corrected = embed2.reshape(B, N, D8)
    extras = (ref_enc, x_enc, embed_corrected)     # mirrors self.extras ordering

    out = x_out if last_layer else jnp.concatenate((x_out, ref), axis=0)
    return out, extras


def trust_diffuser_net_forward(x, anchors, params, *, nb_ref, num_heads,
                               diffusion_steps=3, tau=0.5, last_layer=False):
    # TrustDiffuserNet.forward: tokens = cat((x, anchors), dim=0); run robust block.
    # TODO(synk): the frozen pretrained DeiT backbone around the robust block is skipped.
    tokens = jnp.concatenate((x, anchors), axis=0)
    return trust_diffuser_module(tokens, params, nb_ref=nb_ref, num_heads=num_heads,
                                 diffusion_steps=diffusion_steps, tau=tau,
                                 last_layer=last_layer)


# ----------------------------------------------------------------------------
# Main
# ----------------------------------------------------------------------------
if __name__ == "__main__":
    # Small analog of (in_dim=192, num_heads=3, nb_anchors=5, N=197 tokens)
    B, R, N, D, H = 2, 4, 8, 32, 2          # D//4=8, D//8=4, head dim = 16
    STEPS = 3

    key = jax.random.PRNGKey(0)
    ks = jax.random.split(key, 12)

    def init(k, shape, s=0.05):
        return jax.random.normal(k, shape, jnp.float32) * s

    params = {
        # Projector.encoder = Mlp(D, D//4, D//8)
        "enc_w1": init(ks[0], (D, D // 4)),
        "enc_b1": init(ks[1], (1, D // 4)),
        "enc_w2": init(ks[2], (D // 4, D // 8)),
        "enc_b2": init(ks[3], (1, D // 8)),
        # Diffuser
        "qv_w": init(ks[4], (D, 2 * D)),        # nn.Linear(D, 2D, bias=False)
        "k_w": init(ks[5], (D, D)),             # nn.Linear(D, D, bias=False)
        "proj_w": init(ks[6], (D, D)),          # nn.Linear(D, D)
        "proj_b": init(ks[7], (1, D)),
        "ln_g": jnp.ones((1, D), jnp.float32),  # nn.LayerNorm(D)
        "ln_b": jnp.zeros((1, D), jnp.float32),
    }

    x = jax.random.normal(ks[8], (B, N, D), jnp.float32)
    anchors = jax.random.normal(ks[9], (R, N, D), jnp.float32)

    fwd = jax.jit(functools.partial(
        trust_diffuser_net_forward,
        nb_ref=R, num_heads=H, diffusion_steps=STEPS, tau=0.5, last_layer=False))

    out, extras = fwd(x, anchors, params)
    out = jax.block_until_ready(out)
    jax.block_until_ready(extras)

    assert out.shape == (B + R, N, D), out.shape
    assert extras[0].shape == (R, N, D // 8)
    assert extras[1].shape == (B, N, D // 8)
    assert extras[2].shape == (B, N, D // 8)
    assert bool(jnp.all(jnp.isfinite(out)))
    print("KERNEL_OK")
</pallas_src>

<mosaic_0001>
module attributes {stable_mosaic.version = 11 : i64} {
  func.func @_mlp_kernel(%arg0: i32, %arg1: memref<16x32xf32, #tpu.memory_space<vmem>>, %arg2: memref<32x8xbf16, #tpu.memory_space<vmem>>, %arg3: memref<1x8xf32, #tpu.memory_space<vmem>>, %arg4: memref<8x4xbf16, #tpu.memory_space<vmem>>, %arg5: memref<1x4xf32, #tpu.memory_space<vmem>>, %arg6: memref<16x4xf32, #tpu.memory_space<vmem>>) attributes {dimension_semantics = [#tpu.dimension_semantics<parallel>], iteration_bounds = array<i64: 1>, scalar_prefetch = 0 : i64, scratch_operands = 0 : i64, tpu.core_type = #tpu.core_type<tc>, window_params = [{transform_indices = @transform_0, window_bounds = array<i64: 16, 32>}, {pipeline_mode = #tpu.pipeline_mode<synchronous>, transform_indices = @transform_1, window_bounds = array<i64: 32, 8>}, {pipeline_mode = #tpu.pipeline_mode<synchronous>, transform_indices = @transform_2, window_bounds = array<i64: 1, 8>}, {pipeline_mode = #tpu.pipeline_mode<synchronous>, transform_indices = @transform_3, window_bounds = array<i64: 8, 4>}, {pipeline_mode = #tpu.pipeline_mode<synchronous>, transform_indices = @transform_4, window_bounds = array<i64: 1, 4>}, {transform_indices = @transform_5, window_bounds = array<i64: 16, 4>}]} {
    %c0 = arith.constant 0 : index
    %c0_0 = arith.constant 0 : index
    %0 = vector.load %arg1[%c0, %c0_0] : memref<16x32xf32, #tpu.memory_space<vmem>>, vector<16x32xf32>
    %1 = arith.truncf %0 : vector<16x32xf32> to vector<16x32xbf16>
    %c0_1 = arith.constant 0 : index
    %c0_2 = arith.constant 0 : index
    %2 = vector.load %arg2[%c0_1, %c0_2] : memref<32x8xbf16, #tpu.memory_space<vmem>>, vector<32x8xbf16>
    %cst = arith.constant dense<0.000000e+00> : vector<16x8xf32>
    %3 = tpu.matmul %1, %2, %cst {dimension_numbers = #tpu.dot_dimension_numbers<[1], [0], [0], [1], [0, 0, 1, 1], [], []>} : vector<16x32xbf16>, vector<32x8xbf16>, vector<16x8xf32> -> vector<16x8xf32>
    %c0_3 = arith.constant 0 : index
    %c0_4 = arith.constant 0 : index
    %4 = vector.load %arg3[%c0_3, %c0_4] : memref<1x8xf32, #tpu.memory_space<vmem>>, vector<1x8xf32>
    %5 = vector.broadcast %4 : vector<1x8xf32> to vector<16x8xf32>
    %6 = arith.addf %3, %5 : vector<16x8xf32>
    %cst_5 = arith.constant 5.000000e-01 : f32
    %7 = vector.broadcast %cst_5 : f32 to vector<16x8xf32>
    %8 = arith.mulf %7, %6 : vector<16x8xf32>
    %cst_6 = arith.constant 4.471500e-02 : f32
    %9 = vector.broadcast %cst_6 : f32 to vector<16x8xf32>
    %10 = arith.mulf %9, %6 : vector<16x8xf32>
    %11 = arith.mulf %10, %6 : vector<16x8xf32>
    %12 = arith.mulf %11, %6 : vector<16x8xf32>
    %13 = arith.addf %6, %12 : vector<16x8xf32>
    %cst_7 = arith.constant 0.797884583 : f32
    %14 = vector.broadcast %cst_7 : f32 to vector<16x8xf32>
    %15 = arith.mulf %14, %13 : vector<16x8xf32>
    %16 = math.tanh %15 : vector<16x8xf32>
    %cst_8 = arith.constant 1.000000e+00 : f32
    %17 = vector.broadcast %cst_8 : f32 to vector<16x8xf32>
    %18 = arith.addf %17, %16 : vector<16x8xf32>
    %19 = arith.mulf %8, %18 : vector<16x8xf32>
    %20 = arith.truncf %19 : vector<16x8xf32> to vector<16x8xbf16>
    %c0_9 = arith.constant 0 : index
    %c0_10 = arith.constant 0 : index
    %21 = vector.load %arg4[%c0_9, %c0_10] : memref<8x4xbf16, #tpu.memory_space<vmem>>, vector<8x4xbf16>
    %cst_11 = arith.constant dense<0.000000e+00> : vector<16x4xf32>
    %22 = tpu.matmul %20, %21, %cst_11 {dimension_numbers = #tpu.dot_dimension_numbers<[1], [0], [0], [1], [0, 0, 1, 1], [], []>} : vector<16x8xbf16>, vector<8x4xbf16>, vector<16x4xf32> -> vector<16x4xf32>
    %c0_12 = arith.constant 0 : index
    %c0_13 = arith.constant 0 : index
    %23 = vector.load %arg5[%c0_12, %c0_13] : memref<1x4xf32, #tpu.memory_space<vmem>>, vector<1x4xf32>
    %24 = vector.broadcast %23 : vector<1x4xf32> to vector<16x4xf32>
    %25 = arith.addf %22, %24 : vector<16x4xf32>
    %c0_14 = arith.constant 0 : index
    %c0_15 = arith.constant 0 : index
    %26 = vector.load %arg6[%c0_14, %c0_15] : memref<16x4xf32, #tpu.memory_space<vmem>>, vector<16x4xf32>
    tpu.vector_store %arg6[%c0_14, %c0_15], %25 {strides = array<i32>} : memref<16x4xf32, #tpu.memory_space<vmem>>, vector<16x4xf32>,
    return
  }
  func.func @transform_0(%arg0: i32) -> (i32, i32) {
    %c0_i32 = arith.constant 0 : i32
    %c0_i32_0 = arith.constant 0 : i32
    return %arg0, %c0_i32 : i32, i32
  }
  func.func @transform_1(%arg0: i32) -> (i32, i32) {
    %c0_i32 = arith.constant 0 : i32
    %c0_i32_0 = arith.constant 0 : i32
    %c0_i32_1 = arith.constant 0 : i32
    return %c0_i32, %c0_i32_0 : i32, i32
  }
  func.func @transform_2(%arg0: i32) -> (i32, i32) {
    %c0_i32 = arith.constant 0 : i32
    %c0_i32_0 = arith.constant 0 : i32
    %c0_i32_1 = arith.constant 0 : i32
    return %c0_i32, %c0_i32_0 : i32, i32
  }
  func.func @transform_3(%arg0: i32) -> (i32, i32) {
    %c0_i32 = arith.constant 0 : i32
    %c0_i32_0 = arith.constant 0 : i32
    %c0_i32_1 = arith.constant 0 : i32
    return %c0_i32, %c0_i32_0 : i32, i32
  }
  func.func @transform_4(%arg0: i32) -> (i32, i32) {
    %c0_i32 = arith.constant 0 : i32
    %c0_i32_0 = arith.constant 0 : i32
    %c0_i32_1 = arith.constant 0 : i32
    return %c0_i32, %c0_i32_0 : i32, i32
  }
  func.func @transform_5(%arg0: i32) -> (i32, i32) {
    %c0_i32 = arith.constant 0 : i32
    %c0_i32_0 = arith.constant 0 : i32
    return %arg0, %c0_i32 : i32, i32
  }
}

module attributes {stable_mosaic.version = 11 : i64} {
  func.func @_cos_gate_kernel(%arg0: memref<2x8x4xf32, #tpu.memory_space<vmem>>, %arg1: memref<4x8x4xf32, #tpu.memory_space<vmem>>, %arg2: memref<2x8xf32, #tpu.memory_space<vmem>>) attributes {dimension_semantics = [], scalar_prefetch = 0 : i64, scratch_operands = 0 : i64, tpu.core_type = #tpu.core_type<tc>} {
    %c0 = arith.constant 0 : index
    %c0_0 = arith.constant 0 : index
    %c0_1 = arith.constant 0 : index
    %0 = vector.load %arg0[%c0, %c0_0, %c0_1] : memref<2x8x4xf32, #tpu.memory_space<vmem>>, vector<2x8x4xf32>
    %1 = arith.mulf %0, %0 : vector<2x8x4xf32>
    %cst = arith.constant dense<0.000000e+00> : vector<2x8xf32>
    %2 = vector.multi_reduction <add>, %1, %cst [2] : vector<2x8x4xf32> to vector<2x8xf32>
    %3 = math.sqrt %2 : vector<2x8xf32>
    %cst_2 = arith.constant 0.000000e+00 : f32
    %4 = vector.broadcast %cst_2 : f32 to vector<2x8xf32>
    %c0_3 = arith.constant 0 : index
    %c0_4 = arith.constant 0 : index
    %c0_5 = arith.constant 0 : index
    %5 = vector.load %arg1[%c0_3, %c0_4, %c0_5] : memref<4x8x4xf32, #tpu.memory_space<vmem>>, vector<1x8x4xf32>
    %6 = vector.shape_cast %5 : vector<1x8x4xf32> to vector<8x4xf32>
    %7 = arith.mulf %6, %6 : vector<8x4xf32>
    %cst_6 = arith.constant dense<0.000000e+00> : vector<8xf32>
    %8 = vector.multi_reduction <add>, %7, %cst_6 [1] : vector<8x4xf32> to vector<8xf32>
    %9 = math.sqrt %8 : vector<8xf32>
    %10 = vector.shape_cast %6 : vector<8x4xf32> to vector<1x8x4xf32>
    %11 = vector.broadcast %10 : vector<1x8x4xf32> to vector<2x8x4xf32>
    %12 = arith.mulf %0, %11 : vector<2x8x4xf32>
    %cst_7 = arith.constant dense<0.000000e+00> : vector<2x8xf32>
    %13 = vector.multi_reduction <add>, %12, %cst_7 [2] : vector<2x8x4xf32> to vector<2x8xf32>
    %14 = vector.shape_cast %9 : vector<8xf32> to vector<1x8xf32>
    %15 = vector.broadcast %14 : vector<1x8xf32> to vector<2x8xf32>
    %16 = arith.mulf %3, %15 : vector<2x8xf32>
    %cst_8 = arith.constant 9.99999993E-9 : f32
    %17 = vector.broadcast %cst_8 : f32 to vector<2x8xf32>
    %18 = arith.maximumf %16, %17 : vector<2x8xf32>
    %19 = arith.divf %13, %18 : vector<2x8xf32>
    %20 = arith.addf %4, %19 : vector<2x8xf32>
    %c1 = arith.constant 1 : index
    %c0_9 = arith.constant 0 : index
    %c0_10 = arith.constant 0 : index
    %21 = vector.load %arg1[%c1, %c0_9, %c0_10] : memref<4x8x4xf32, #tpu.memory_space<vmem>>, vector<1x8x4xf32>
    %22 = vector.shape_cast %21 : vector<1x8x4xf32> to vector<8x4xf32>
    %23 = arith.mulf %22, %22 : vector<8x4xf32>
    %cst_11 = arith.constant dense<0.000000e+00> : vector<8xf32>
    %24 = vector.multi_reduction <add>, %23, %cst_11 [1] : vector<8x4xf32> to vector<8xf32>
    %25 = math.sqrt %24 : vector<8xf32>
    %26 = vector.shape_cast %22 : vector<8x4xf32> to vector<1x8x4xf32>
    %27 = vector.broadcast %26 : vector<1x8x4xf32> to vector<2x8x4xf32>
    %28 = arith.mulf %0, %27 : vector<2x8x4xf32>
    %cst_12 = arith.constant dense<0.000000e+00> : vector<2x8xf32>
    %29 = vector.multi_reduction <add>, %28, %cst_12 [2] : vector<2x8x4xf32> to vector<2x8xf32>
    %30 = vector.shape_cast %25 : vector<8xf32> to vector<1x8xf32>
    %31 = vector.broadcast %30 : vector<1x8xf32> to vector<2x8xf32>
    %32 = arith.mulf %3, %31 : vector<2x8xf32>
    %cst_13 = arith.constant 9.99999993E-9 : f32
    %33 = vector.broadcast %cst_13 : f32 to vector<2x8xf32>
    %34 = arith.maximumf %32, %33 : vector<2x8xf32>
    %35 = arith.divf %29, %34 : vector<2x8xf32>
    %36 = arith.addf %20, %35 : vector<2x8xf32>
    %c2 = arith.constant 2 : index
    %c0_14 = arith.constant 0 : index
    %c0_15 = arith.constant 0 : index
    %37 = vector.load %arg1[%c2, %c0_14, %c0_15] : memref<4x8x4xf32, #tpu.memory_space<vmem>>, vector<1x8x4xf32>
    %38 = vector.shape_cast %37 : vector<1x8x4xf32> to vector<8x4xf32>
    %39 = arith.mulf %38, %38 : vector<8x4xf32>
    %cst_16 = arith.constant dense<0.000000e+00> : vector<8xf32>
    %40 = vector.multi_reduction <add>, %39, %cst_16 [1] : vector<8x4xf32> to vector<8xf32>
    %41 = math.sqrt %40 : vector<8xf32>
    %42 = vector.shape_cast %38 : vector<8x4xf32> to vector<1x8x4xf32>
    %43 = vector.broadcast %42 : vector<1x8x4xf32> to vector<2x8x4xf32>
    %44 = arith.mulf %0, %43 : vector<2x8x4xf32>
    %cst_17 = arith.constant dense<0.000000e+00> : vector<2x8xf32>
    %45 = vector.multi_reduction <add>, %44, %cst_17 [2] : vector<2x8x4xf32> to vector<2x8xf32>
    %46 = vector.shape_cast %41 : vector<8xf32> to vector<1x8xf32>
    %47 = vector.broadcast %46 : vector<1x8xf32> to vector<2x8xf32>
    %48 = arith.mulf %3, %47 : vector<2x8xf32>
    %cst_18 = arith.constant 9.99999993E-9 : f32
    %49 = vector.broadcast %cst_18 : f32 to vector<2x8xf32>
    %50 = arith.maximumf %48, %49 : vector<2x8xf32>
    %51 = arith.divf %45, %50 : vector<2x8xf32>
    %52 = arith.addf %36, %51 : vector<2x8xf32>
    %c3 = arith.constant 3 : index
    %c0_19 = arith.constant 0 : index
    %c0_20 = arith.constant 0 : index
    %53 = vector.load %arg1[%c3, %c0_19, %c0_20] : memref<4x8x4xf32, #tpu.memory_space<vmem>>, vector<1x8x4xf32>
    %54 = vector.shape_cast %53 : vector<1x8x4xf32> to vector<8x4xf32>
    %55 = arith.mulf %54, %54 : vector<8x4xf32>
    %cst_21 = arith.constant dense<0.000000e+00> : vector<8xf32>
    %56 = vector.multi_reduction <add>, %55, %cst_21 [1] : vector<8x4xf32> to vector<8xf32>
    %57 = math.sqrt %56 : vector<8xf32>
    %58 = vector.shape_cast %54 : vector<8x4xf32> to vector<1x8x4xf32>
    %59 = vector.broadcast %58 : vector<1x8x4xf32> to vector<2x8x4xf32>
    %60 = arith.mulf %0, %59 : vector<2x8x4xf32>
    %cst_22 = arith.constant dense<0.000000e+00> : vector<2x8xf32>
    %61 = vector.multi_reduction <add>, %60, %cst_22 [2] : vector<2x8x4xf32> to vector<2x8xf32>
    %62 = vector.shape_cast %57 : vector<8xf32> to vector<1x8xf32>
    %63 = vector.broadcast %62 : vector<1x8xf32> to vector<2x8xf32>
    %64 = arith.mulf %3, %63 : vector<2x8xf32>
    %cst_23 = arith.constant 9.99999993E-9 : f32
    %65 = vector.broadcast %cst_23 : f32 to vector<2x8xf32>
    %66 = arith.maximumf %64, %65 : vector<2x8xf32>
    %67 = arith.divf %61, %66 : vector<2x8xf32>
    %68 = arith.addf %52, %67 : vector<2x8xf32>
    %cst_24 = arith.constant 4.000000e+00 : f32
    %69 = vector.broadcast %cst_24 : f32 to vector<2x8xf32>
    %70 = arith.divf %68, %69 : vector<2x8xf32>
    %cst_25 = arith.constant 1.000000e+00 : f32
    %71 = vector.broadcast %cst_25 : f32 to vector<2x8xf32>
    %72 = arith.addf %70, %71 : vector<2x8xf32>
    %cst_26 = arith.constant 5.000000e-01 : f32
    %73 = vector.broadcast %cst_26 : f32 to vector<2x8xf32>
    %74 = arith.mulf %72, %73 : vector<2x8xf32>
    %cst_27 = arith.constant 5.000000e-01 : f32
    %75 = vector.broadcast %cst_27 : f32 to vector<2x8xf32>
    %76 = arith.subf %74, %75 : vector<2x8xf32>
    %cst_28 = arith.constant 2.500000e+01 : f32
    %77 = vector.broadcast %cst_28 : f32 to vector<2x8xf32>
    %78 = arith.mulf %77, %76 : vector<2x8xf32>
    %79 = math.tanh %78 : vector<2x8xf32>
    %cst_29 = arith.constant 5.000000e-01 : f32
    %80 = vector.broadcast %cst_29 : f32 to vector<2x8xf32>
    %81 = arith.mulf %80, %79 : vector<2x8xf32>
    %cst_30 = arith.constant 5.000000e-01 : f32
    %82 = vector.broadcast %cst_30 : f32 to vector<2x8xf32>
    %83 = arith.addf %82, %81 : vector<2x8xf32>
    %c0_31 = arith.constant 0 : index
    %c0_32 = arith.constant 0 : index
    %84 = vector.load %arg2[%c0_31, %c0_32] : memref<2x8xf32, #tpu.memory_space<vmem>>, vector<2x8xf32>
    tpu.vector_store %arg2[%c0_31, %c0_32], %83 {strides = array<i32>} : memref<2x8xf32, #tpu.memory_space<vmem>>, vector<2x8xf32>,
    return
  }
}

module attributes {stable_mosaic.version = 11 : i64} {
  func.func @_matmul_kernel(%arg0: i32, %arg1: memref<32x32xf32, #tpu.memory_space<vmem>>, %arg2: memref<32x32xbf16, #tpu.memory_space<vmem>>, %arg3: memref<32x32xbf16, #tpu.memory_space<vmem>>) attributes {dimension_semantics = [#tpu.dimension_semantics<parallel>], iteration_bounds = array<i64: 1>, scalar_prefetch = 0 : i64, scratch_operands = 0 : i64, tpu.core_type = #tpu.core_type<tc>, window_params = [{transform_indices = @transform_0, window_bounds = array<i64: 32, 32>}, {pipeline_mode = #tpu.pipeline_mode<synchronous>, transform_indices = @transform_1, window_bounds = array<i64: 32, 32>}, {transform_indices = @transform_2, window_bounds = array<i64: 32, 32>}]} {
    %c0 = arith.constant 0 : index
    %c0_0 = arith.constant 0 : index
    %0 = vector.load %arg1[%c0, %c0_0] : memref<32x32xf32, #tpu.memory_space<vmem>>, vector<32x32xf32>
    %1 = arith.truncf %0 : vector<32x32xf32> to vector<32x32xbf16>
    %c0_1 = arith.constant 0 : index
    %c0_2 = arith.constant 0 : index
    %2 = vector.load %arg2[%c0_1, %c0_2] : memref<32x32xbf16, #tpu.memory_space<vmem>>, vector<32x32xbf16>
    %cst = arith.constant dense<0.000000e+00> : vector<32x32xf32>
    %3 = tpu.matmul %1, %2, %cst {dimension_numbers = #tpu.dot_dimension_numbers<[1], [0], [0], [1], [0, 0, 1, 1], [], []>} : vector<32x32xbf16>, vector<32x32xbf16>, vector<32x32xf32> -> vector<32x32xf32>
    %4 = arith.truncf %3 : vector<32x32xf32> to vector<32x32xbf16>
    %c0_3 = arith.constant 0 : index
    %c0_4 = arith.constant 0 : index
    %5 = vector.load %arg3[%c0_3, %c0_4] : memref<32x32xbf16, #tpu.memory_space<vmem>>, vector<32x32xbf16>
    tpu.vector_store %arg3[%c0_3, %c0_4], %4 {strides = array<i32>} : memref<32x32xbf16, #tpu.memory_space<vmem>>, vector<32x32xbf16>,
    return
  }
  func.func @transform_0(%arg0: i32) -> (i32, i32) {
    %c0_i32 = arith.constant 0 : i32
    %c0_i32_0 = arith.constant 0 : i32
    return %arg0, %c0_i32 : i32, i32
  }
  func.func @transform_1(%arg0: i32) -> (i32, i32) {
    %c0_i32 = arith.constant 0 : i32
    %c0_i32_0 = arith.constant 0 : i32
    %c0_i32_1 = arith.constant 0 : i32
    return %c0_i32, %c0_i32_0 : i32, i32
  }
  func.func @transform_2(%arg0: i32) -> (i32, i32) {
    %c0_i32 = arith.constant 0 : i32
    %c0_i32_0 = arith.constant 0 : i32
    return %arg0, %c0_i32 : i32, i32
  }
}

module attributes {stable_mosaic.version = 11 : i64} {
  func.func @_mlp_kernel(%arg0: i32, %arg1: memref<32x32xf32, #tpu.memory_space<vmem>>, %arg2: memref<32x8xbf16, #tpu.memory_space<vmem>>, %arg3: memref<1x8xf32, #tpu.memory_space<vmem>>, %arg4: memref<8x4xbf16, #tpu.memory_space<vmem>>, %arg5: memref<1x4xf32, #tpu.memory_space<vmem>>, %arg6: memref<32x4xf32, #tpu.memory_space<vmem>>) attributes {dimension_semantics = [#tpu.dimension_semantics<parallel>], iteration_bounds = array<i64: 1>, scalar_prefetch = 0 : i64, scratch_operands = 0 : i64, tpu.core_type = #tpu.core_type<tc>, window_params = [{transform_indices = @transform_0, window_bounds = array<i64: 32, 32>}, {pipeline_mode = #tpu.pipeline_mode<synchronous>, transform_indices = @transform_1, window_bounds = array<i64: 32, 8>}, {pipeline_mode = #tpu.pipeline_mode<synchronous>, transform_indices = @transform_2, window_bounds = array<i64: 1, 8>}, {pipeline_mode = #tpu.pipeline_mode<synchronous>, transform_indices = @transform_3, window_bounds = array<i64: 8, 4>}, {pipeline_mode = #tpu.pipeline_mode<synchronous>, transform_indices = @transform_4, window_bounds = array<i64: 1, 4>}, {transform_indices = @transform_5, window_bounds = array<i64: 32, 4>}]} {
    %c0 = arith.constant 0 : index
    %c0_0 = arith.constant 0 : index
    %0 = vector.load %arg1[%c0, %c0_0] : memref<32x32xf32, #tpu.memory_space<vmem>>, vector<32x32xf32>
    %1 = arith.truncf %0 : vector<32x32xf32> to vector<32x32xbf16>
    %c0_1 = arith.constant 0 : index
    %c0_2 = arith.constant 0 : index
    %2 = vector.load %arg2[%c0_1, %c0_2] : memref<32x8xbf16, #tpu.memory_space<vmem>>, vector<32x8xbf16>
    %cst = arith.constant dense<0.000000e+00> : vector<32x8xf32>
    %3 = tpu.matmul %1, %2, %cst {dimension_numbers = #tpu.dot_dimension_numbers<[1], [0], [0], [1], [0, 0, 1, 1], [], []>} : vector<32x32xbf16>, vector<32x8xbf16>, vector<32x8xf32> -> vector<32x8xf32>
    %c0_3 = arith.constant 0 : index
    %c0_4 = arith.constant 0 : index
    %4 = vector.load %arg3[%c0_3, %c0_4] : memref<1x8xf32, #tpu.memory_space<vmem>>, vector<1x8xf32>
    %5 = vector.broadcast %4 : vector<1x8xf32> to vector<32x8xf32>
    %6 = arith.addf %3, %5 : vector<32x8xf32>
    %cst_5 = arith.constant 5.000000e-01 : f32
    %7 = vector.broadcast %cst_5 : f32 to vector<32x8xf32>
    %8 = arith.mulf %7, %6 : vector<32x8xf32>
    %cst_6 = arith.constant 4.471500e-02 : f32
    %9 = vector.broadcast %cst_6 : f32 to vector<32x8xf32>
    %10 = arith.mulf %9, %6 : vector<32x8xf32>
    %11 = arith.mulf %10, %6 : vector<32x8xf32>
    %12 = arith.mulf %11, %6 : vector<32x8xf32>
    %13 = arith.addf %6, %12 : vector<32x8xf32>
    %cst_7 = arith.constant 0.797884583 : f32
    %14 = vector.broadcast %cst_7 : f32 to vector<32x8xf32>
    %15 = arith.mulf %14, %13 : vector<32x8xf32>
    %16 = math.tanh %15 : vector<32x8xf32>
    %cst_8 = arith.constant 1.000000e+00 : f32
    %17 = vector.broadcast %cst_8 : f32 to vector<32x8xf32>
    %18 = arith.addf %17, %16 : vector<32x8xf32>
    %19 = arith.mulf %8, %18 : vector<32x8xf32>
    %20 = arith.truncf %19 : vector<32x8xf32> to vector<32x8xbf16>
    %c0_9 = arith.constant 0 : index
    %c0_10 = arith.constant 0 : index
    %21 = vector.load %arg4[%c0_9, %c0_10] : memref<8x4xbf16, #tpu.memory_space<vmem>>, vector<8x4xbf16>
    %cst_11 = arith.constant dense<0.000000e+00> : vector<32x4xf32>
    %22 = tpu.matmul %20, %21, %cst_11 {dimension_numbers = #tpu.dot_dimension_numbers<[1], [0], [0], [1], [0, 0, 1, 1], [], []>} : vector<32x8xbf16>, vector<8x4xbf16>, vector<32x4xf32> -> vector<32x4xf32>
    %c0_12 = arith.constant 0 : index
    %c0_13 = arith.constant 0 : index
    %23 = vector.load %arg5[%c0_12, %c0_13] : memref<1x4xf32, #tpu.memory_space<vmem>>, vector<1x4xf32>
    %24 = vector.broadcast %23 : vector<1x4xf32> to vector<32x4xf32>
    %25 = arith.addf %22, %24 : vector<32x4xf32>
    %c0_14 = arith.constant 0 : index
    %c0_15 = arith.constant 0 : index
    %26 = vector.load %arg6[%c0_14, %c0_15] : memref<32x4xf32, #tpu.memory_space<vmem>>, vector<32x4xf32>
    tpu.vector_store %arg6[%c0_14, %c0_15], %25 {strides = array<i32>} : memref<32x4xf32, #tpu.memory_space<vmem>>, vector<32x4xf32>,
    return
  }
  func.func @transform_0(%arg0: i32) -> (i32, i32) {
    %c0_i32 = arith.constant 0 : i32
    %c0_i32_0 = arith.constant 0 : i32
    return %arg0, %c0_i32 : i32, i32
  }
  func.func @transform_1(%arg0: i32) -> (i32, i32) {
    %c0_i32 = arith.constant 0 : i32
    %c0_i32_0 = arith.constant 0 : i32
    %c0_i32_1 = arith.constant 0 : i32
    return %c0_i32, %c0_i32_0 : i32, i32
  }
  func.func @transform_2(%arg0: i32) -> (i32, i32) {
    %c0_i32 = arith.constant 0 : i32
    %c0_i32_0 = arith.constant 0 : i32
    %c0_i32_1 = arith.constant 0 : i32
    return %c0_i32, %c0_i32_0 : i32, i32
  }
  func.func @transform_3(%arg0: i32) -> (i32, i32) {
    %c0_i32 = arith.constant 0 : i32
    %c0_i32_0 = arith.constant 0 : i32
    %c0_i32_1 = arith.constant 0 : i32
    return %c0_i32, %c0_i32_0 : i32, i32
  }
  func.func @transform_4(%arg0: i32) -> (i32, i32) {
    %c0_i32 = arith.constant 0 : i32
    %c0_i32_0 = arith.constant 0 : i32
    %c0_i32_1 = arith.constant 0 : i32
    return %c0_i32, %c0_i32_0 : i32, i32
  }
  func.func @transform_5(%arg0: i32) -> (i32, i32) {
    %c0_i32 = arith.constant 0 : i32
    %c0_i32_0 = arith.constant 0 : i32
    return %arg0, %c0_i32 : i32, i32
  }
}

module attributes {stable_mosaic.version = 11 : i64} {
  func.func @_matmul_gated_kernel(%arg0: i32, %arg1: memref<16x32xf32, #tpu.memory_space<vmem>>, %arg2: memref<16x1xf32, #tpu.memory_space<vmem>>, %arg3: memref<32x64xbf16, #tpu.memory_space<vmem>>, %arg4: memref<16x64xbf16, #tpu.memory_space<vmem>>) attributes {dimension_semantics = [#tpu.dimension_semantics<parallel>], iteration_bounds = array<i64: 1>, scalar_prefetch = 0 : i64, scratch_operands = 0 : i64, tpu.core_type = #tpu.core_type<tc>, window_params = [{transform_indices = @transform_0, window_bounds = array<i64: 16, 32>}, {transform_indices = @transform_1, window_bounds = array<i64: 16, 1>}, {pipeline_mode = #tpu.pipeline_mode<synchronous>, transform_indices = @transform_2, window_bounds = array<i64: 32, 64>}, {transform_indices = @transform_3, window_bounds = array<i64: 16, 64>}]} {
    %c0 = arith.constant 0 : index
    %c0_0 = arith.constant 0 : index
    %0 = vector.load %arg1[%c0, %c0_0] : memref<16x32xf32, #tpu.memory_space<vmem>>, vector<16x32xf32>
    %c0_1 = arith.constant 0 : index
    %c0_2 = arith.constant 0 : index
    %1 = vector.load %arg2[%c0_1, %c0_2] : memref<16x1xf32, #tpu.memory_space<vmem>>, vector<16x1xf32>
    %2 = vector.broadcast %1 : vector<16x1xf32> to vector<16x32xf32>
    %3 = arith.mulf %0, %2 : vector<16x32xf32>
    %4 = arith.truncf %3 : vector<16x32xf32> to vector<16x32xbf16>
    %c0_3 = arith.constant 0 : index
    %c0_4 = arith.constant 0 : index
    %5 = vector.load %arg3[%c0_3, %c0_4] : memref<32x64xbf16, #tpu.memory_space<vmem>>, vector<32x64xbf16>
    %cst = arith.constant dense<0.000000e+00> : vector<16x64xf32>
    %6 = tpu.matmul %4, %5, %cst {dimension_numbers = #tpu.dot_dimension_numbers<[1], [0], [0], [1], [0, 0, 1, 1], [], []>} : vector<16x32xbf16>, vector<32x64xbf16>, vector<16x64xf32> -> vector<16x64xf32>
    %7 = arith.truncf %6 : vector<16x64xf32> to vector<16x64xbf16>
    %c0_5 = arith.constant 0 : index
    %c0_6 = arith.constant 0 : index
    %8 = vector.load %arg4[%c0_5, %c0_6] : memref<16x64xbf16, #tpu.memory_space<vmem>>, vector<16x64xbf16>
    tpu.vector_store %arg4[%c0_5, %c0_6], %7 {strides = array<i32>} : memref<16x64xbf16, #tpu.memory_space<vmem>>, vector<16x64xbf16>,
    return
  }
  func.func @transform_0(%arg0: i32) -> (i32, i32) {
    %c0_i32 = arith.constant 0 : i32
    %c0_i32_0 = arith.constant 0 : i32
    return %arg0, %c0_i32 : i32, i32
  }
  func.func @transform_1(%arg0: i32) -> (i32, i32) {
    %c0_i32 = arith.constant 0 : i32
    %c0_i32_0 = arith.constant 0 : i32
    return %arg0, %c0_i32 : i32, i32
  }
  func.func @transform_2(%arg0: i32) -> (i32, i32) {
    %c0_i32 = arith.constant 0 : i32
    %c0_i32_0 = arith.constant 0 : i32
    %c0_i32_1 = arith.constant 0 : i32
    return %c0_i32, %c0_i32_0 : i32, i32
  }
  func.func @transform_3(%arg0: i32) -> (i32, i32) {
    %c0_i32 = arith.constant 0 : i32
    %c0_i32_0 = arith.constant 0 : i32
    return %arg0, %c0_i32 : i32, i32
  }
}

module attributes {stable_mosaic.version = 11 : i64} {
  func.func @_matmul_kernel(%arg0: i32, %arg1: memref<16x32xf32, #tpu.memory_space<vmem>>, %arg2: memref<32x64xbf16, #tpu.memory_space<vmem>>, %arg3: memref<16x64xbf16, #tpu.memory_space<vmem>>) attributes {dimension_semantics = [#tpu.dimension_semantics<parallel>], iteration_bounds = array<i64: 1>, scalar_prefetch = 0 : i64, scratch_operands = 0 : i64, tpu.core_type = #tpu.core_type<tc>, window_params = [{transform_indices = @transform_0, window_bounds = array<i64: 16, 32>}, {pipeline_mode = #tpu.pipeline_mode<synchronous>, transform_indices = @transform_1, window_bounds = array<i64: 32, 64>}, {transform_indices = @transform_2, window_bounds = array<i64: 16, 64>}]} {
    %c0 = arith.constant 0 : index
    %c0_0 = arith.constant 0 : index
    %0 = vector.load %arg1[%c0, %c0_0] : memref<16x32xf32, #tpu.memory_space<vmem>>, vector<16x32xf32>
    %1 = arith.truncf %0 : vector<16x32xf32> to vector<16x32xbf16>
    %c0_1 = arith.constant 0 : index
    %c0_2 = arith.constant 0 : index
    %2 = vector.load %arg2[%c0_1, %c0_2] : memref<32x64xbf16, #tpu.memory_space<vmem>>, vector<32x64xbf16>
    %cst = arith.constant dense<0.000000e+00> : vector<16x64xf32>
    %3 = tpu.matmul %1, %2, %cst {dimension_numbers = #tpu.dot_dimension_numbers<[1], [0], [0], [1], [0, 0, 1, 1], [], []>} : vector<16x32xbf16>, vector<32x64xbf16>, vector<16x64xf32> -> vector<16x64xf32>
    %4 = arith.truncf %3 : vector<16x64xf32> to vector<16x64xbf16>
    %c0_3 = arith.constant 0 : index
    %c0_4 = arith.constant 0 : index
    %5 = vector.load %arg3[%c0_3, %c0_4] : memref<16x64xbf16, #tpu.memory_space<vmem>>, vector<16x64xbf16>
    tpu.vector_store %arg3[%c0_3, %c0_4], %4 {strides = array<i32>} : memref<16x64xbf16, #tpu.memory_space<vmem>>, vector<16x64xbf16>,
    return
  }
  func.func @transform_0(%arg0: i32) -> (i32, i32) {
    %c0_i32 = arith.constant 0 : i32
    %c0_i32_0 = arith.constant 0 : i32
    return %arg0, %c0_i32 : i32, i32
  }
  func.func @transform_1(%arg0: i32) -> (i32, i32) {
    %c0_i32 = arith.constant 0 : i32
    %c0_i32_0 = arith.constant 0 : i32
    %c0_i32_1 = arith.constant 0 : i32
    return %c0_i32, %c0_i32_0 : i32, i32
  }
  func.func @transform_2(%arg0: i32) -> (i32, i32) {
    %c0_i32 = arith.constant 0 : i32
    %c0_i32_0 = arith.constant 0 : i32
    return %arg0, %c0_i32 : i32, i32
  }
}

module attributes {stable_mosaic.version = 11 : i64} {
  func.func @_attn_kernel(%arg0: i32, %arg1: memref<1x8x64xbf16, #tpu.memory_space<vmem>>, %arg2: memref<4x8x32xbf16, #tpu.memory_space<vmem>>, %arg3: memref<1x2x8x16xf32, #tpu.memory_space<vmem>>) attributes {dimension_semantics = [#tpu.dimension_semantics<parallel>], iteration_bounds = array<i64: 2>, scalar_prefetch = 0 : i64, scratch_operands = 0 : i64, tpu.core_type = #tpu.core_type<tc>, window_params = [{transform_indices = @transform_0, window_bounds = array<i64: 1, 8, 64>}, {pipeline_mode = #tpu.pipeline_mode<synchronous>, transform_indices = @transform_1, window_bounds = array<i64: 4, 8, 32>}, {transform_indices = @transform_2, window_bounds = array<i64: 1, 2, 8, 16>}]} {
    %c0 = arith.constant 0 : index
    %c0_0 = arith.constant 0 : index
    %c0_1 = arith.constant 0 : index
    %0 = vector.load %arg1[%c0, %c0_0, %c0_1] : memref<1x8x64xbf16, #tpu.memory_space<vmem>>, vector<1x8x16xbf16>
    %1 = vector.shape_cast %0 : vector<1x8x16xbf16> to vector<8x16xbf16>
    %c0_2 = arith.constant 0 : index
    %c0_3 = arith.constant 0 : index
    %c32 = arith.constant 32 : index
    %2 = vector.load %arg1[%c0_2, %c0_3, %c32] : memref<1x8x64xbf16, #tpu.memory_space<vmem>>, vector<1x8x16xbf16>
    %3 = vector.shape_cast %2 : vector<1x8x16xbf16> to vector<8x16xbf16>
    %cst = arith.constant 0.000000e+00 : f32
    %4 = vector.broadcast %cst : f32 to vector<8x16xf32>
    %c0_4 = arith.constant 0 : index
    %c0_5 = arith.constant 0 : index
    %c0_6 = arith.constant 0 : index
    %5 = vector.load %arg2[%c0_4, %c0_5, %c0_6] : memref<4x8x32xbf16, #tpu.memory_space<vmem>>, vector<1x8x16xbf16>
    %6 = vector.shape_cast %5 : vector<1x8x16xbf16> to vector<8x16xbf16>
    %cst_7 = arith.constant dense<0.000000e+00> : vector<8x8xf32>
    %7 = tpu.matmul %1, %6, %cst_7 {dimension_numbers = #tpu.dot_dimension_numbers<[1], [1], [0], [0], [0, 0, 1, 0], [], []>} : vector<8x16xbf16>, vector<8x16xbf16>, vector<8x8xf32> -> vector<8x8xf32>
    %8 = arith.truncf %7 : vector<8x8xf32> to vector<8x8xbf16>
    %cst_8 = arith.constant dense<0.000000e+00> : vector<8x8xf32>
    %9 = tpu.matmul %8, %8, %cst_8 {dimension_numbers = #tpu.dot_dimension_numbers<[1], [1], [0], [0], [0, 0, 1, 0], [], []>} : vector<8x8xbf16>, vector<8x8xbf16>, vector<8x8xf32> -> vector<8x8xf32>
    %10 = arith.truncf %9 : vector<8x8xf32> to vector<8x8xbf16>
    %cst_9 = arith.constant dense<0.000000e+00> : vector<8x16xf32>
    %11 = tpu.matmul %10, %3, %cst_9 {dimension_numbers = #tpu.dot_dimension_numbers<[1], [0], [0], [1], [0, 0, 1, 1], [], []>} : vector<8x8xbf16>, vector<8x16xbf16>, vector<8x16xf32> -> vector<8x16xf32>
    %12 = arith.addf %4, %11 : vector<8x16xf32>
    %c1 = arith.constant 1 : index
    %c0_10 = arith.constant 0 : index
    %c0_11 = arith.constant 0 : index
    %13 = vector.load %arg2[%c1, %c0_10, %c0_11] : memref<4x8x32xbf16, #tpu.memory_space<vmem>>, vector<1x8x16xbf16>
    %14 = vector.shape_cast %13 : vector<1x8x16xbf16> to vector<8x16xbf16>
    %cst_12 = arith.constant dense<0.000000e+00> : vector<8x8xf32>
    %15 = tpu.matmul %1, %14, %cst_12 {dimension_numbers = #tpu.dot_dimension_numbers<[1], [1], [0], [0], [0, 0, 1, 0], [], []>} : vector<8x16xbf16>, vector<8x16xbf16>, vector<8x8xf32> -> vector<8x8xf32>
    %16 = arith.truncf %15 : vector<8x8xf32> to vector<8x8xbf16>
    %cst_13 = arith.constant dense<0.000000e+00> : vector<8x8xf32>
    %17 = tpu.matmul %16, %16, %cst_13 {dimension_numbers = #tpu.dot_dimension_numbers<[1], [1], [0], [0], [0, 0, 1, 0], [], []>} : vector<8x8xbf16>, vector<8x8xbf16>, vector<8x8xf32> -> vector<8x8xf32>
    %18 = arith.truncf %17 : vector<8x8xf32> to vector<8x8xbf16>
    %cst_14 = arith.constant dense<0.000000e+00> : vector<8x16xf32>
    %19 = tpu.matmul %18, %3, %cst_14 {dimension_numbers = #tpu.dot_dimension_numbers<[1], [0], [0], [1], [0, 0, 1, 1], [], []>} : vector<8x8xbf16>, vector<8x16xbf16>, vector<8x16xf32> -> vector<8x16xf32>
    %20 = arith.addf %12, %19 : vector<8x16xf32>
    %c2 = arith.constant 2 : index
    %c0_15 = arith.constant 0 : index
    %c0_16 = arith.constant 0 : index
    %21 = vector.load %arg2[%c2, %c0_15, %c0_16] : memref<4x8x32xbf16, #tpu.memory_space<vmem>>, vector<1x8x16xbf16>
    %22 = vector.shape_cast %21 : vector<1x8x16xbf16> to vector<8x16xbf16>
    %cst_17 = arith.constant dense<0.000000e+00> : vector<8x8xf32>
    %23 = tpu.matmul %1, %22, %cst_17 {dimension_numbers = #tpu.dot_dimension_numbers<[1], [1], [0], [0], [0, 0, 1, 0], [], []>} : vector<8x16xbf16>, vector<8x16xbf16>, vector<8x8xf32> -> vector<8x8xf32>
    %24 = arith.truncf %23 : vector<8x8xf32> to vector<8x8xbf16>
    %cst_18 = arith.constant dense<0.000000e+00> : vector<8x8xf32>
    %25 = tpu.matmul %24, %24, %cst_18 {dimension_numbers = #tpu.dot_dimension_numbers<[1], [1], [0], [0], [0, 0, 1, 0], [], []>} : vector<8x8xbf16>, vector<8x8xbf16>, vector<8x8xf32> -> vector<8x8xf32>
    %26 = arith.truncf %25 : vector<8x8xf32> to vector<8x8xbf16>
    %cst_19 = arith.constant dense<0.000000e+00> : vector<8x16xf32>
    %27 = tpu.matmul %26, %3, %cst_19 {dimension_numbers = #tpu.dot_dimension_numbers<[1], [0], [0], [1], [0, 0, 1, 1], [], []>} : vector<8x8xbf16>, vector<8x16xbf16>, vector<8x16xf32> -> vector<8x16xf32>
    %28 = arith.addf %20, %27 : vector<8x16xf32>
    %c3 = arith.constant 3 : index
    %c0_20 = arith.constant 0 : index
    %c0_21 = arith.constant 0 : index
    %29 = vector.load %arg2[%c3, %c0_20, %c0_21] : memref<4x8x32xbf16, #tpu.memory_space<vmem>>, vector<1x8x16xbf16>
    %30 = vector.shape_cast %29 : vector<1x8x16xbf16> to vector<8x16xbf16>
    %cst_22 = arith.constant dense<0.000000e+00> : vector<8x8xf32>
    %31 = tpu.matmul %1, %30, %cst_22 {dimension_numbers = #tpu.dot_dimension_numbers<[1], [1], [0], [0], [0, 0, 1, 0], [], []>} : vector<8x16xbf16>, vector<8x16xbf16>, vector<8x8xf32> -> vector<8x8xf32>
    %32 = arith.truncf %31 : vector<8x8xf32> to vector<8x8xbf16>
    %cst_23 = arith.constant dense<0.000000e+00> : vector<8x8xf32>
    %33 = tpu.matmul %32, %32, %cst_23 {dimension_numbers = #tpu.dot_dimension_numbers<[1], [1], [0], [0], [0, 0, 1, 0], [], []>} : vector<8x8xbf16>, vector<8x8xbf16>, vector<8x8xf32> -> vector<8x8xf32>
    %34 = arith.truncf %33 : vector<8x8xf32> to vector<8x8xbf16>
    %cst_24 = arith.constant dense<0.000000e+00> : vector<8x16xf32>
    %35 = tpu.matmul %34, %3, %cst_24 {dimension_numbers = #tpu.dot_dimension_numbers<[1], [0], [0], [1], [0, 0, 1, 1], [], []>} : vector<8x8xbf16>, vector<8x16xbf16>, vector<8x16xf32> -> vector<8x16xf32>
    %36 = arith.addf %28, %35 : vector<8x16xf32>
    %c0_25 = arith.constant 0 : index
    %c0_26 = arith.constant 0 : index
    %c0_27 = arith.constant 0 : index
    %c0_28 = arith.constant 0 : index
    %37 = vector.load %arg3[%c0_25, %c0_26, %c0_27, %c0_28] : memref<1x2x8x16xf32, #tpu.memory_space<vmem>>, vector<1x1x8x16xf32>
    %38 = vector.shape_cast %37 : vector<1x1x8x16xf32> to vector<8x16xf32>
    %39 = vector.shape_cast %36 : vector<8x16xf32> to vector<1x1x8x16xf32>
    tpu.vector_store %arg3[%c0_25, %c0_26, %c0_27, %c0_28], %39 {strides = array<i32>} : memref<1x2x8x16xf32, #tpu.memory_space<vmem>>, vector<1x1x8x16xf32>,
    %c0_29 = arith.constant 0 : index
    %c0_30 = arith.constant 0 : index
    %c16 = arith.constant 16 : index
    %40 = vector.load %arg1[%c0_29, %c0_30, %c16] : memref<1x8x64xbf16, #tpu.memory_space<vmem>>, vector<1x8x16xbf16>
    %41 = vector.shape_cast %40 : vector<1x8x16xbf16> to vector<8x16xbf16>
    %c0_31 = arith.constant 0 : index
    %c0_32 = arith.constant 0 : index
    %c48 = arith.constant 48 : index
    %42 = vector.load %arg1[%c0_31, %c0_32, %c48] : memref<1x8x64xbf16, #tpu.memory_space<vmem>>, vector<1x8x16xbf16>
    %43 = vector.shape_cast %42 : vector<1x8x16xbf16> to vector<8x16xbf16>
    %cst_33 = arith.constant 0.000000e+00 : f32
    %44 = vector.broadcast %cst_33 : f32 to vector<8x16xf32>
    %c0_34 = arith.constant 0 : index
    %c0_35 = arith.constant 0 : index
    %c16_36 = arith.constant 16 : index
    %45 = vector.load %arg2[%c0_34, %c0_35, %c16_36] : memref<4x8x32xbf16, #tpu.memory_space<vmem>>, vector<1x8x16xbf16>
    %46 = vector.shape_cast %45 : vector<1x8x16xbf16> to vector<8x16xbf16>
    %cst_37 = arith.constant dense<0.000000e+00> : vector<8x8xf32>
    %47 = tpu.matmul %41, %46, %cst_37 {dimension_numbers = #tpu.dot_dimension_numbers<[1], [1], [0], [0], [0, 0, 1, 0], [], []>} : vector<8x16xbf16>, vector<8x16xbf16>, vector<8x8xf32> -> vector<8x8xf32>
    %48 = arith.truncf %47 : vector<8x8xf32> to vector<8x8xbf16>
    %cst_38 = arith.constant dense<0.000000e+00> : vector<8x8xf32>
    %49 = tpu.matmul %48, %48, %cst_38 {dimension_numbers = #tpu.dot_dimension_numbers<[1], [1], [0], [0], [0, 0, 1, 0], [], []>} : vector<8x8xbf16>, vector<8x8xbf16>, vector<8x8xf32> -> vector<8x8xf32>
    %50 = arith.truncf %49 : vector<8x8xf32> to vector<8x8xbf16>
    %cst_39 = arith.constant dense<0.000000e+00> : vector<8x16xf32>
    %51 = tpu.matmul %50, %43, %cst_39 {dimension_numbers = #tpu.dot_dimension_numbers<[1], [0], [0], [1], [0, 0, 1, 1], [], []>} : vector<8x8xbf16>, vector<8x16xbf16>, vector<8x16xf32> -> vector<8x16xf32>
    %52 = arith.addf %44, %51 : vector<8x16xf32>
    %c1_40 = arith.constant 1 : index
    %c0_41 = arith.constant 0 : index
    %c16_42 = arith.constant 16 : index
    %53 = vector.load %arg2[%c1_40, %c0_41, %c16_42] : memref<4x8x32xbf16, #tpu.memory_space<vmem>>, vector<1x8x16xbf16>
    %54 = vector.shape_cast %53 : vector<1x8x16xbf16> to vector<8x16xbf16>
    %cst_43 = arith.constant dense<0.000000e+00> : vector<8x8xf32>
    %55 = tpu.matmul %41, %54, %cst_43 {dimension_numbers = #tpu.dot_dimension_numbers<[1], [1], [0], [0], [0, 0, 1, 0], [], []>} : vector<8x16xbf16>, vector<8x16xbf16>, vector<8x8xf32> -> vector<8x8xf32>
    %56 = arith.truncf %55 : vector<8x8xf32> to vector<8x8xbf16>
    %cst_44 = arith.constant dense<0.000000e+00> : vector<8x8xf32>
    %57 = tpu.matmul %56, %56, %cst_44 {dimension_numbers = #tpu.dot_dimension_numbers<[1], [1], [0], [0], [0, 0, 1, 0], [], []>} : vector<8x8xbf16>, vector<8x8xbf16>, vector<8x8xf32> -> vector<8x8xf32>
    %58 = arith.truncf %57 : vector<8x8xf32> to vector<8x8xbf16>
    %cst_45 = arith.constant dense<0.000000e+00> : vector<8x16xf32>
    %59 = tpu.matmul %58, %43, %cst_45 {dimension_numbers = #tpu.dot_dimension_numbers<[1], [0], [0], [1], [0, 0, 1, 1], [], []>} : vector<8x8xbf16>, vector<8x16xbf16>, vector<8x16xf32> -> vector<8x16xf32>
    %60 = arith.addf %52, %59 : vector<8x16xf32>
    %c2_46 = arith.constant 2 : index
    %c0_47 = arith.constant 0 : index
    %c16_48 = arith.constant 16 : index
    %61 = vector.load %arg2[%c2_46, %c0_47, %c16_48] : memref<4x8x32xbf16, #tpu.memory_space<vmem>>, vector<1x8x16xbf16>
    %62 = vector.shape_cast %61 : vector<1x8x16xbf16> to vector<8x16xbf16>
    %cst_49 = arith.constant dense<0.000000e+00> : vector<8x8xf32>
    %63 = tpu.matmul %41, %62, %cst_49 {dimension_numbers = #tpu.dot_dimension_numbers<[1], [1], [0], [0], [0, 0, 1, 0], [], []>} : vector<8x16xbf16>, vector<8x16xbf16>, vector<8x8xf32> -> vector<8x8xf32>
    %64 = arith.truncf %63 : vector<8x8xf32> to vector<8x8xbf16>
    %cst_50 = arith.constant dense<0.000000e+00> : vector<8x8xf32>
    %65 = tpu.matmul %64, %64, %cst_50 {dimension_numbers = #tpu.dot_dimension_numbers<[1], [1], [0], [0], [0, 0, 1, 0], [], []>} : vector<8x8xbf16>, vector<8x8xbf16>, vector<8x8xf32> -> vector<8x8xf32>
    %66 = arith.truncf %65 : vector<8x8xf32> to vector<8x8xbf16>
    %cst_51 = arith.constant dense<0.000000e+00> : vector<8x16xf32>
    %67 = tpu.matmul %66, %43, %cst_51 {dimension_numbers = #tpu.dot_dimension_numbers<[1], [0], [0], [1], [0, 0, 1, 1], [], []>} : vector<8x8xbf16>, vector<8x16xbf16>, vector<8x16xf32> -> vector<8x16xf32>
    %68 = arith.addf %60, %67 : vector<8x16xf32>
    %c3_52 = arith.constant 3 : index
    %c0_53 = arith.constant 0 : index
    %c16_54 = arith.constant 16 : index
    %69 = vector.load %arg2[%c3_52, %c0_53, %c16_54] : memref<4x8x32xbf16, #tpu.memory_space<vmem>>, vector<1x8x16xbf16>
    %70 = vector.shape_cast %69 : vector<1x8x16xbf16> to vector<8x16xbf16>
    %cst_55 = arith.constant dense<0.000000e+00> : vector<8x8xf32>
    %71 = tpu.matmul %41, %70, %cst_55 {dimension_numbers = #tpu.dot_dimension_numbers<[1], [1], [0], [0], [0, 0, 1, 0], [], []>} : vector<8x16xbf16>, vector<8x16xbf16>, vector<8x8xf32> -> vector<8x8xf32>
    %72 = arith.truncf %71 : vector<8x8xf32> to vector<8x8xbf16>
    %cst_56 = arith.constant dense<0.000000e+00> : vector<8x8xf32>
    %73 = tpu.matmul %72, %72, %cst_56 {dimension_numbers = #tpu.dot_dimension_numbers<[1], [1], [0], [0], [0, 0, 1, 0], [], []>} : vector<8x8xbf16>, vector<8x8xbf16>, vector<8x8xf32> -> vector<8x8xf32>
    %74 = arith.truncf %73 : vector<8x8xf32> to vector<8x8xbf16>
    %cst_57 = arith.constant dense<0.000000e+00> : vector<8x16xf32>
    %75 = tpu.matmul %74, %43, %cst_57 {dimension_numbers = #tpu.dot_dimension_numbers<[1], [0], [0], [1], [0, 0, 1, 1], [], []>} : vector<8x8xbf16>, vector<8x16xbf16>, vector<8x16xf32> -> vector<8x16xf32>
    %76 = arith.addf %68, %75 : vector<8x16xf32>
    %c0_58 = arith.constant 0 : index
    %c1_59 = arith.constant 1 : index
    %c0_60 = arith.constant 0 : index
    %c0_61 = arith.constant 0 : index
    %77 = vector.load %arg3[%c0_58, %c1_59, %c0_60, %c0_61] : memref<1x2x8x16xf32, #tpu.memory_space<vmem>>, vector<1x1x8x16xf32>
    %78 = vector.shape_cast %77 : vector<1x1x8x16xf32> to vector<8x16xf32>
    %79 = vector.shape_cast %76 : vector<8x16xf32> to vector<1x1x8x16xf32>
    tpu.vector_store %arg3[%c0_58, %c1_59, %c0_60, %c0_61], %79 {strides = array<i32>} : memref<1x2x8x16xf32, #tpu.memory_space<vmem>>, vector<1x1x8x16xf32>,
    return
  }
  func.func @transform_0(%arg0: i32) -> (i32, i32, i32) {
    %c0_i32 = arith.constant 0 : i32
    %c0_i32_0 = arith.constant 0 : i32
    %c0_i32_1 = arith.constant 0 : i32
    return %arg0, %c0_i32, %c0_i32_0 : i32, i32, i32
  }
  func.func @transform_1(%arg0: i32) -> (i32, i32, i32) {
    %c0_i32 = arith.constant 0 : i32
    %c0_i32_0 = arith.constant 0 : i32
    %c0_i32_1 = arith.constant 0 : i32
    %c0_i32_2 = arith.constant 0 : i32
    return %c0_i32, %c0_i32_0, %c0_i32_1 : i32, i32, i32
  }
  func.func @transform_2(%arg0: i32) -> (i32, i32, i32, i32) {
    %c0_i32 = arith.constant 0 : i32
    %c0_i32_0 = arith.constant 0 : i32
    %c0_i32_1 = arith.constant 0 : i32
    %c0_i32_2 = arith.constant 0 : i32
    return %arg0, %c0_i32, %c0_i32_0, %c0_i32_1 : i32, i32, i32, i32
  }
}

module attributes {stable_mosaic.version = 11 : i64} {
  func.func @_proj_ln_kernel(%arg0: i32, %arg1: memref<16x32xf32, #tpu.memory_space<vmem>>, %arg2: memref<32x32xbf16, #tpu.memory_space<vmem>>, %arg3: memref<1x32xf32, #tpu.memory_space<vmem>>, %arg4: memref<1x32xf32, #tpu.memory_space<vmem>>, %arg5: memref<1x32xf32, #tpu.memory_space<vmem>>, %arg6: memref<16x32xf32, #tpu.memory_space<vmem>>) attributes {dimension_semantics = [#tpu.dimension_semantics<parallel>], iteration_bounds = array<i64: 1>, scalar_prefetch = 0 : i64, scratch_operands = 0 : i64, tpu.core_type = #tpu.core_type<tc>, window_params = [{transform_indices = @transform_0, window_bounds = array<i64: 16, 32>}, {pipeline_mode = #tpu.pipeline_mode<synchronous>, transform_indices = @transform_1, window_bounds = array<i64: 32, 32>}, {pipeline_mode = #tpu.pipeline_mode<synchronous>, transform_indices = @transform_2, window_bounds = array<i64: 1, 32>}, {pipeline_mode = #tpu.pipeline_mode<synchronous>, transform_indices = @transform_3, window_bounds = array<i64: 1, 32>}, {pipeline_mode = #tpu.pipeline_mode<synchronous>, transform_indices = @transform_4, window_bounds = array<i64: 1, 32>}, {transform_indices = @transform_5, window_bounds = array<i64: 16, 32>}]} {
    %c0 = arith.constant 0 : index
    %c0_0 = arith.constant 0 : index
    %0 = vector.load %arg1[%c0, %c0_0] : memref<16x32xf32, #tpu.memory_space<vmem>>, vector<16x32xf32>
    %1 = arith.truncf %0 : vector<16x32xf32> to vector<16x32xbf16>
    %c0_1 = arith.constant 0 : index
    %c0_2 = arith.constant 0 : index
    %2 = vector.load %arg2[%c0_1, %c0_2] : memref<32x32xbf16, #tpu.memory_space<vmem>>, vector<32x32xbf16>
    %cst = arith.constant dense<0.000000e+00> : vector<16x32xf32>
    %3 = tpu.matmul %1, %2, %cst {dimension_numbers = #tpu.dot_dimension_numbers<[1], [0], [0], [1], [0, 0, 1, 1], [], []>} : vector<16x32xbf16>, vector<32x32xbf16>, vector<16x32xf32> -> vector<16x32xf32>
    %c0_3 = arith.constant 0 : index
    %c0_4 = arith.constant 0 : index
    %4 = vector.load %arg3[%c0_3, %c0_4] : memref<1x32xf32, #tpu.memory_space<vmem>>, vector<1x32xf32>
    %5 = vector.broadcast %4 : vector<1x32xf32> to vector<16x32xf32>
    %6 = arith.addf %3, %5 : vector<16x32xf32>
    %cst_5 = arith.constant dense<0.000000e+00> : vector<16xf32>
    %7 = vector.multi_reduction <add>, %6, %cst_5 [1] : vector<16x32xf32> to vector<16xf32>
    %8 = vector.shape_cast %7 : vector<16xf32> to vector<16x1xf32>
    %cst_6 = arith.constant 3.200000e+01 : f32
    %9 = vector.broadcast %cst_6 : f32 to vector<16x1xf32>
    %10 = arith.divf %8, %9 : vector<16x1xf32>
    %11 = vector.broadcast %10 : vector<16x1xf32> to vector<16x32xf32>
    %12 = arith.subf %6, %11 : vector<16x32xf32>
    %13 = arith.mulf %12, %12 : vector<16x32xf32>
    %cst_7 = arith.constant dense<0.000000e+00> : vector<16xf32>
    %14 = vector.multi_reduction <add>, %13, %cst_7 [1] : vector<16x32xf32> to vector<16xf32>
    %15 = vector.shape_cast %14 : vector<16xf32> to vector<16x1xf32>
    %cst_8 = arith.constant 3.200000e+01 : f32
    %16 = vector.broadcast %cst_8 : f32 to vector<16x1xf32>
    %17 = arith.divf %15, %16 : vector<16x1xf32>
    %18 = vector.broadcast %10 : vector<16x1xf32> to vector<16x32xf32>
    %19 = arith.subf %6, %18 : vector<16x32xf32>
    %cst_9 = arith.constant 9.99999974E-6 : f32
    %20 = vector.broadcast %cst_9 : f32 to vector<16x1xf32>
    %21 = arith.addf %17, %20 : vector<16x1xf32>
    %22 = math.rsqrt %21 : vector<16x1xf32>
    %23 = vector.broadcast %22 : vector<16x1xf32> to vector<16x32xf32>
    %24 = arith.mulf %19, %23 : vector<16x32xf32>
    %c0_10 = arith.constant 0 : index
    %c0_11 = arith.constant 0 : index
    %25 = vector.load %arg4[%c0_10, %c0_11] : memref<1x32xf32, #tpu.memory_space<vmem>>, vector<1x32xf32>
    %26 = vector.broadcast %25 : vector<1x32xf32> to vector<16x32xf32>
    %27 = arith.mulf %24, %26 : vector<16x32xf32>
    %c0_12 = arith.constant 0 : index
    %c0_13 = arith.constant 0 : index
    %28 = vector.load %arg5[%c0_12, %c0_13] : memref<1x32xf32, #tpu.memory_space<vmem>>, vector<1x32xf32>
    %29 = vector.broadcast %28 : vector<1x32xf32> to vector<16x32xf32>
    %30 = arith.addf %27, %29 : vector<16x32xf32>
    %c0_14 = arith.constant 0 : index
    %c0_15 = arith.constant 0 : index
    %31 = vector.load %arg6[%c0_14, %c0_15] : memref<16x32xf32, #tpu.memory_space<vmem>>, vector<16x32xf32>
    tpu.vector_store %arg6[%c0_14, %c0_15], %30 {strides = array<i32>} : memref<16x32xf32, #tpu.memory_space<vmem>>, vector<16x32xf32>,
    return
  }
  func.func @transform_0(%arg0: i32) -> (i32, i32) {
    %c0_i32 = arith.constant 0 : i32
    %c0_i32_0 = arith.constant 0 : i32
    return %arg0, %c0_i32 : i32, i32
  }
  func.func @transform_1(%arg0: i32) -> (i32, i32) {
    %c0_i32 = arith.constant 0 : i32
    %c0_i32_0 = arith.constant 0 : i32
    %c0_i32_1 = arith.constant 0 : i32
    return %c0_i32, %c0_i32_0 : i32, i32
  }
  func.func @transform_2(%arg0: i32) -> (i32, i32) {
    %c0_i32 = arith.constant 0 : i32
    %c0_i32_0 = arith.constant 0 : i32
    %c0_i32_1 = arith.constant 0 : i32
    return %c0_i32, %c0_i32_0 : i32, i32
  }
  func.func @transform_3(%arg0: i32) -> (i32, i32) {
    %c0_i32 = arith.constant 0 : i32
    %c0_i32_0 = arith.constant 0 : i32
    %c0_i32_1 = arith.constant 0 : i32
    return %c0_i32, %c0_i32_0 : i32, i32
  }
  func.func @transform_4(%arg0: i32) -> (i32, i32) {
    %c0_i32 = arith.constant 0 : i32
    %c0_i32_0 = arith.constant 0 : i32
    %c0_i32_1 = arith.constant 0 : i32
    return %c0_i32, %c0_i32_0 : i32, i32
  }
  func.func @transform_5(%arg0: i32) -> (i32, i32) {
    %c0_i32 = arith.constant 0 : i32
    %c0_i32_0 = arith.constant 0 : i32
    return %arg0, %c0_i32 : i32, i32
  }
}

module attributes {stable_mosaic.version = 11 : i64} {
  func.func @_mix_encode_kernel(%arg0: i32, %arg1: memref<16x32xf32, #tpu.memory_space<vmem>>, %arg2: memref<16x32xf32, #tpu.memory_space<vmem>>, %arg3: memref<16x1xf32, #tpu.memory_space<vmem>>, %arg4: memref<32x8xbf16, #tpu.memory_space<vmem>>, %arg5: memref<1x8xf32, #tpu.memory_space<vmem>>, %arg6: memref<8x4xbf16, #tpu.memory_space<vmem>>, %arg7: memref<1x4xf32, #tpu.memory_space<vmem>>, %arg8: memref<16x32xf32, #tpu.memory_space<vmem>>, %arg9: memref<16x4xf32, #tpu.memory_space<vmem>>) attributes {dimension_semantics = [#tpu.dimension_semantics<parallel>], iteration_bounds = array<i64: 1>, scalar_prefetch = 0 : i64, scratch_operands = 0 : i64, tpu.core_type = #tpu.core_type<tc>, window_params = [{transform_indices = @transform_0, window_bounds = array<i64: 16, 32>}, {transform_indices = @transform_1, window_bounds = array<i64: 16, 32>}, {transform_indices = @transform_2, window_bounds = array<i64: 16, 1>}, {pipeline_mode = #tpu.pipeline_mode<synchronous>, transform_indices = @transform_3, window_bounds = array<i64: 32, 8>}, {pipeline_mode = #tpu.pipeline_mode<synchronous>, transform_indices = @transform_4, window_bounds = array<i64: 1, 8>}, {pipeline_mode = #tpu.pipeline_mode<synchronous>, transform_indices = @transform_5, window_bounds = array<i64: 8, 4>}, {pipeline_mode = #tpu.pipeline_mode<synchronous>, transform_indices = @transform_6, window_bounds = array<i64: 1, 4>}, {transform_indices = @transform_7, window_bounds = array<i64: 16, 32>}, {transform_indices = @transform_8, window_bounds = array<i64: 16, 4>}]} {
    %c0 = arith.constant 0 : index
    %c0_0 = arith.constant 0 : index
    %0 = vector.load %arg3[%c0, %c0_0] : memref<16x1xf32, #tpu.memory_space<vmem>>, vector<16x1xf32>
    %c0_1 = arith.constant 0 : index
    %c0_2 = arith.constant 0 : index
    %1 = vector.load %arg2[%c0_1, %c0_2] : memref<16x32xf32, #tpu.memory_space<vmem>>, vector<16x32xf32>
    %2 = vector.broadcast %0 : vector<16x1xf32> to vector<16x32xf32>
    %3 = arith.mulf %2, %1 : vector<16x32xf32>
    %cst = arith.constant 1.000000e+00 : f32
    %4 = vector.broadcast %cst : f32 to vector<16x1xf32>
    %5 = arith.subf %4, %0 : vector<16x1xf32>
    %c0_3 = arith.constant 0 : index
    %c0_4 = arith.constant 0 : index
    %6 = vector.load %arg1[%c0_3, %c0_4] : memref<16x32xf32, #tpu.memory_space<vmem>>, vector<16x32xf32>
    %7 = vector.broadcast %5 : vector<16x1xf32> to vector<16x32xf32>
    %8 = arith.mulf %7, %6 : vector<16x32xf32>
    %9 = arith.addf %3, %8 : vector<16x32xf32>
    %c0_5 = arith.constant 0 : index
    %c0_6 = arith.constant 0 : index
    %10 = vector.load %arg8[%c0_5, %c0_6] : memref<16x32xf32, #tpu.memory_space<vmem>>, vector<16x32xf32>
    tpu.vector_store %arg8[%c0_5, %c0_6], %9 {strides = array<i32>} : memref<16x32xf32, #tpu.memory_space<vmem>>, vector<16x32xf32>,
    %11 = arith.truncf %9 : vector<16x32xf32> to vector<16x32xbf16>
    %c0_7 = arith.constant 0 : index
    %c0_8 = arith.constant 0 : index
    %12 = vector.load %arg4[%c0_7, %c0_8] : memref<32x8xbf16, #tpu.memory_space<vmem>>, vector<32x8xbf16>
    %cst_9 = arith.constant dense<0.000000e+00> : vector<16x8xf32>
    %13 = tpu.matmul %11, %12, %cst_9 {dimension_numbers = #tpu.dot_dimension_numbers<[1], [0], [0], [1], [0, 0, 1, 1], [], []>} : vector<16x32xbf16>, vector<32x8xbf16>, vector<16x8xf32> -> vector<16x8xf32>
    %c0_10 = arith.constant 0 : index
    %c0_11 = arith.constant 0 : index
    %14 = vector.load %arg5[%c0_10, %c0_11] : memref<1x8xf32, #tpu.memory_space<vmem>>, vector<1x8xf32>
    %15 = vector.broadcast %14 : vector<1x8xf32> to vector<16x8xf32>
    %16 = arith.addf %13, %15 : vector<16x8xf32>
    %cst_12 = arith.constant 5.000000e-01 : f32
    %17 = vector.broadcast %cst_12 : f32 to vector<16x8xf32>
    %18 = arith.mulf %17, %16 : vector<16x8xf32>
    %cst_13 = arith.constant 4.471500e-02 : f32
    %19 = vector.broadcast %cst_13 : f32 to vector<16x8xf32>
    %20 = arith.mulf %19, %16 : vector<16x8xf32>
    %21 = arith.mulf %20, %16 : vector<16x8xf32>
    %22 = arith.mulf %21, %16 : vector<16x8xf32>
    %23 = arith.addf %16, %22 : vector<16x8xf32>
    %cst_14 = arith.constant 0.797884583 : f32
    %24 = vector.broadcast %cst_14 : f32 to vector<16x8xf32>
    %25 = arith.mulf %24, %23 : vector<16x8xf32>
    %26 = math.tanh %25 : vector<16x8xf32>
    %cst_15 = arith.constant 1.000000e+00 : f32
    %27 = vector.broadcast %cst_15 : f32 to vector<16x8xf32>
    %28 = arith.addf %27, %26 : vector<16x8xf32>
    %29 = arith.mulf %18, %28 : vector<16x8xf32>
    %30 = arith.truncf %29 : vector<16x8xf32> to vector<16x8xbf16>
    %c0_16 = arith.constant 0 : index
    %c0_17 = arith.constant 0 : index
    %31 = vector.load %arg6[%c0_16, %c0_17] : memref<8x4xbf16, #tpu.memory_space<vmem>>, vector<8x4xbf16>
    %cst_18 = arith.constant dense<0.000000e+00> : vector<16x4xf32>
    %32 = tpu.matmul %30, %31, %cst_18 {dimension_numbers = #tpu.dot_dimension_numbers<[1], [0], [0], [1], [0, 0, 1, 1], [], []>} : vector<16x8xbf16>, vector<8x4xbf16>, vector<16x4xf32> -> vector<16x4xf32>
    %c0_19 = arith.constant 0 : index
    %c0_20 = arith.constant 0 : index
    %33 = vector.load %arg7[%c0_19, %c0_20] : memref<1x4xf32, #tpu.memory_space<vmem>>, vector<1x4xf32>
    %34 = vector.broadcast %33 : vector<1x4xf32> to vector<16x4xf32>
    %35 = arith.addf %32, %34 : vector<16x4xf32>
    %c0_21 = arith.constant 0 : index
    %c0_22 = arith.constant 0 : index
    %36 = vector.load %arg9[%c0_21, %c0_22] : memref<16x4xf32, #tpu.memory_space<vmem>>, vector<16x4xf32>
    tpu.vector_store %arg9[%c0_21, %c0_22], %35 {strides = array<i32>} : memref<16x4xf32, #tpu.memory_space<vmem>>, vector<16x4xf32>,
    return
  }
  func.func @transform_0(%arg0: i32) -> (i32, i32) {
    %c0_i32 = arith.constant 0 : i32
    %c0_i32_0 = arith.constant 0 : i32
    return %arg0, %c0_i32 : i32, i32
  }
  func.func @transform_1(%arg0: i32) -> (i32, i32) {
    %c0_i32 = arith.constant 0 : i32
    %c0_i32_0 = arith.constant 0 : i32
    return %arg0, %c0_i32 : i32, i32
  }
  func.func @transform_2(%arg0: i32) -> (i32, i32) {
    %c0_i32 = arith.constant 0 : i32
    %c0_i32_0 = arith.constant 0 : i32
    return %arg0, %c0_i32 : i32, i32
  }
  func.func @transform_3(%arg0: i32) -> (i32, i32) {
    %c0_i32 = arith.constant 0 : i32
    %c0_i32_0 = arith.constant 0 : i32
    %c0_i32_1 = arith.constant 0 : i32
    return %c0_i32, %c0_i32_0 : i32, i32
  }
  func.func @transform_4(%arg0: i32) -> (i32, i32) {
    %c0_i32 = arith.constant 0 : i32
    %c0_i32_0 = arith.constant 0 : i32
    %c0_i32_1 = arith.constant 0 : i32
    return %c0_i32, %c0_i32_0 : i32, i32
  }
  func.func @transform_5(%arg0: i32) -> (i32, i32) {
    %c0_i32 = arith.constant 0 : i32
    %c0_i32_0 = arith.constant 0 : i32
    %c0_i32_1 = arith.constant 0 : i32
    return %c0_i32, %c0_i32_0 : i32, i32
  }
  func.func @transform_6(%arg0: i32) -> (i32, i32) {
    %c0_i32 = arith.constant 0 : i32
    %c0_i32_0 = arith.constant 0 : i32
    %c0_i32_1 = arith.constant 0 : i32
    return %c0_i32, %c0_i32_0 : i32, i32
  }
  func.func @transform_7(%arg0: i32) -> (i32, i32) {
    %c0_i32 = arith.constant 0 : i32
    %c0_i32_0 = arith.constant 0 : i32
    return %arg0, %c0_i32 : i32, i32
  }
  func.func @transform_8(%arg0: i32) -> (i32, i32) {
    %c0_i32 = arith.constant 0 : i32
    %c0_i32_0 = arith.constant 0 : i32
    return %arg0, %c0_i32 : i32, i32
  }
}

</mosaic_0001>

<llo_original>
// kernel: trust_diffuser_net_forward.16
$region0: #{trust_diffuser_net_forward.16}
  #allocation0 [shape = 'u32[]', space=smem, size = 0x4, offset = 0x4, fixed_abs, tag = 'smem constant byte address 0x4 - core index']
  #allocation1 [shape = 'u32[72,128]{1,0:T(1,128)}', space=vmem, size = 0x9000, scoped, tag = 'internal scratch']
  %s0 = inlined_call_operand.vmem [shape: f32[2,8,4], index: 0, kind: input, shape index: {}]
  %s1 = inlined_call_operand.vmem [shape: f32[4,8,4], index: 1, kind: input, shape index: {}]
  %s2 = inlined_call_operand.vmem [shape: f32[2,8], index: 2, kind: output, shape index: {}]
  %s3 = sld [smem:[#allocation0]]
  $region18: #{trust_diffuser_net_forward.16} parent=0
    _
  %s5 = ssub.s32 1, %s3
  %s6 = scalar_select 0, %s5, %s3
  // Predicated region
  $region2: #{trust_diffuser_net_forward.16} parent=0 // pred_check
    _
  $region3: #{trust_diffuser_net_forward.16} parent=0 // pred_check_branch
    %8 = sbr.rel (0) target = $region5
  $region4: #{trust_diffuser_net_forward.16} parent=0 // pred_region
    _
  $region5: #{trust_diffuser_net_forward.16} parent=0 // pred_fallthru
    _
  // Predicated region
  $region6: #{trust_diffuser_net_forward.16} parent=0 // pred_check
    _
  $region7: #{trust_diffuser_net_forward.16} parent=0 // pred_check_branch
    %10 = sbr.rel (0) target = $region9
  $region8: #{trust_diffuser_net_forward.16} parent=0 // pred_region
    _
  $region9: #{trust_diffuser_net_forward.16} parent=0 // pred_fallthru
    _
  %v11 = vld [vmem:[%s0] sm:$0xff]
  %v12 = vld [vmem:[%s0 + $0x8] sm:$0xff]
  %v13 = vmul.f32 %v11, %v11
  %v14 = vmul.f32 %v12, %v12
  %vm15 = vcmask 31744
  %v16 = vsel %vm15, %v13, 0.0
  %17 = vadd.xlane.f32.xlu0 %v16
  %v18 = vpop.xlane.xlu0 %17
  %v19 = vsel %vm15, %v14, 0.0
  %20 = vadd.xlane.f32.xlu0 %v19
  %v21 = vpop.xlane.xlu0 %20
  %v22 = vrsqrt.pop %v18
  %v23 = vmul.f32 %v22, %v18
  %v24 = vmul.f32 %v23, %v22
  %v25 = vmul.f32 0.5, %v24
  %v26 = vsub.f32 1.5, %v25
  %v27 = vmul.f32 %v22, %v26
  %v28 = vmul.f32 %v18, %v27
  %vm29 = vcmp.eq.f32.partialorder %v18, inf
  %v30 = vsel %vm29, %v18, %v28
  %vm31 = vcmp.eq.f32.partialorder %v18, 0.0
  %v32 = vand.u32 %v18, 2147483648
  %v33 = vsel %vm31, %v32, %v30
  %v34 = vrsqrt.pop %v21
  %v35 = vmul.f32 %v34, %v21
  %v36 = vmul.f32 %v35, %v34
  %v37 = vmul.f32 0.5, %v36
  %v38 = vsub.f32 1.5, %v37
  %v39 = vmul.f32 %v34, %v38
  %v40 = vmul.f32 %v21, %v39
  %vm41 = vcmp.eq.f32.partialorder %v21, inf
  %v42 = vsel %vm41, %v21, %v40
  %vm43 = vcmp.eq.f32.partialorder %v21, 0.0
  %v44 = vand.u32 %v21, 2147483648
  %v45 = vsel %vm43, %v44, %v42
  %v46 = vld [vmem:[%s1] sm:$0xff]
  %v47 = vmul.f32 %v46, %v46
  %v48 = vsel %vm15, %v47, 0.0
  %49 = vadd.xlane.f32.xlu0 %v48
  %v50 = vpop.xlane.xlu0 %49
  %v51 = vrsqrt.pop %v50
  %v52 = vmul.f32 %v51, %v50
  %v53 = vmul.f32 %v52, %v51
  %v54 = vmul.f32 0.5, %v53
  %v55 = vsub.f32 1.5, %v54
  %v56 = vmul.f32 %v51, %v55
  %v57 = vmul.f32 %v50, %v56
  %vm58 = vcmp.eq.f32.partialorder %v50, inf
  %v59 = vsel %vm58, %v50, %v57
  %vm60 = vcmp.eq.f32.partialorder %v50, 0.0
  %v61 = vand.u32 %v50, 2147483648
  %v62 = vsel %vm60, %v61, %v59
  %v63 = vmul.f32 %v11, %v46
  %v64 = vmul.f32 %v12, %v46
  %v65 = vsel %vm15, %v63, 0.0
  %66 = vadd.xlane.f32.xlu0 %v65
  %v67 = vpop.xlane.xlu0 %66
  %v68 = vsel %vm15, %v64, 0.0
  %69 = vadd.xlane.f32.xlu0 %v68
  %v70 = vpop.xlane.xlu0 %69
  %v71 = vmul.f32 %v33, %v62
  %v72 = vmul.f32 %v45, %v62
  %v73 = vmax.f32 %v71, 1e-08
  %v74 = vmax.f32 %v72, 1e-08
  %v75 = vrcp.pop %v73
  %v76 = vmul.f32 %v73, %v75
  %v77 = vsub.f32 1.0, %v76
  %v78 = vmul.f32 %v75, %v77
  %v79 = vadd.f32 %v75, %v78
  %vm80 = vweird.f32 %v73
  %vm81 = vweird.f32 %v75
  %vm82 = vmor %vm80, %vm81
  %v83 = vsel %vm82, %v75, %v79
  %v84 = vand.u32 2147483647, %v73
  %vm85 = vcmp.eq.f32.partialorder %v84, 8.507059e+37
  %v86 = vand.u32 %v73, 2147483648
  %v87 = vor.u32 1.1754944e-38, %v86
  %v88 = vsel %vm85, %v87, %v83
  %v89 = vmul.f32 %v67, %v88
  %v90 = vrcp.pop %v74
  %v91 = vmul.f32 %v74, %v90
  %v92 = vsub.f32 1.0, %v91
  %v93 = vmul.f32 %v90, %v92
  %v94 = vadd.f32 %v90, %v93
  %vm95 = vweird.f32 %v74
  %vm96 = vweird.f32 %v90
  %vm97 = vmor %vm95, %vm96
  %v98 = vsel %vm97, %v90, %v94
  %v99 = vand.u32 2147483647, %v74
  %vm100 = vcmp.eq.f32.partialorder %v99, 8.507059e+37
  %v101 = vand.u32 %v74, 2147483648
  %v102 = vor.u32 1.1754944e-38, %v101
  %v103 = vsel %vm100, %v102, %v98
  %v104 = vmul.f32 %v70, %v103
  %v105 = vadd.f32 %v89, 0.0
  %v106 = vadd.f32 %v104, 0.0
  %s107 = scalar_lea.vmem %s1, 8
  %v108 = vld [vmem:[%s107] sm:$0xff]
  %v109 = vmul.f32 %v108, %v108
  %v110 = vsel %vm15, %v109, 0.0
  %111 = vadd.xlane.f32.xlu0 %v110
  %v112 = vpop.xlane.xlu0 %111
  %v113 = vrsqrt.pop %v112
  %v114 = vmul.f32 %v113, %v112
  %v115 = vmul.f32 %v114, %v113
  %v116 = vmul.f32 0.5, %v115
  %v117 = vsub.f32 1.5, %v116
  %v118 = vmul.f32 %v113, %v117
  %v119 = vmul.f32 %v112, %v118
  %vm120 = vcmp.eq.f32.partialorder %v112, inf
  %v121 = vsel %vm120, %v112, %v119
  %vm122 = vcmp.eq.f32.partialorder %v112, 0.0
  %v123 = vand.u32 %v112, 2147483648
  %v124 = vsel %vm122, %v123, %v121
  %v125 = vmul.f32 %v11, %v108
  %v126 = vmul.f32 %v12, %v108
  %v127 = vsel %vm15, %v125, 0.0
  %128 = vadd.xlane.f32.xlu0 %v127
  %v129 = vpop.xlane.xlu0 %128
  %v130 = vsel %vm15, %v126, 0.0
  %131 = vadd.xlane.f32.xlu0 %v130
  %v132 = vpop.xlane.xlu0 %131
  %v133 = vmul.f32 %v33, %v124
  %v134 = vmul.f32 %v45, %v124
  %v135 = vmax.f32 %v133, 1e-08
  %v136 = vmax.f32 %v134, 1e-08
  %v137 = vrcp.pop %v135
  %v138 = vmul.f32 %v135, %v137
  %v139 = vsub.f32 1.0, %v138
  %v140 = vmul.f32 %v137, %v139
  %v141 = vadd.f32 %v137, %v140
  %vm142 = vweird.f32 %v135
  %vm143 = vweird.f32 %v137
  %vm144 = vmor %vm142, %vm143
  %v145 = vsel %vm144, %v137, %v141
  %v146 = vand.u32 2147483647, %v135
  %vm147 = vcmp.eq.f32.partialorder %v146, 8.507059e+37
  %v148 = vand.u32 %v135, 2147483648
  %v149 = vor.u32 1.1754944e-38, %v148
  %v150 = vsel %vm147, %v149, %v145
  %v151 = vmul.f32 %v129, %v150
  %v152 = vrcp.pop %v136
  %v153 = vmul.f32 %v136, %v152
  %v154 = vsub.f32 1.0, %v153
  %v155 = vmul.f32 %v152, %v154
  %v156 = vadd.f32 %v152, %v155
  %vm157 = vweird.f32 %v136
  %vm158 = vweird.f32 %v152
  %vm159 = vmor %vm157, %vm158
  %v160 = vsel %vm159, %v152, %v156
  %v161 = vand.u32 2147483647, %v136
  %vm162 = vcmp.eq.f32.partialorder %v161, 8.507059e+37
  %v163 = vand.u32 %v136, 2147483648
  %v164 = vor.u32 1.1754944e-38, %v163
  %v165 = vsel %vm162, %v164, %v160
  %v166 = vmul.f32 %v132, %v165
  %v167 = vadd.f32 %v105, %v151
  %v168 = vadd.f32 %v106, %v166
  %s169 = scalar_lea.vmem %s1, 16
  %v170 = vld [vmem:[%s169] sm:$0xff]
  %v171 = vmul.f32 %v170, %v170
  %v172 = vsel %vm15, %v171, 0.0
  %173 = vadd.xlane.f32.xlu0 %v172
  %v174 = vpop.xlane.xlu0 %173
  %v175 = vrsqrt.pop %v174
  %v176 = vmul.f32 %v175, %v174
  %v177 = vmul.f32 %v176, %v175
  %v178 = vmul.f32 0.5, %v177
  %v179 = vsub.f32 1.5, %v178
  %v180 = vmul.f32 %v175, %v179
  %v181 = vmul.f32 %v174, %v180
  %vm182 = vcmp.eq.f32.partialorder %v174, inf
  %v183 = vsel %vm182, %v174, %v181
  %vm184 = vcmp.eq.f32.partialorder %v174, 0.0
  %v185 = vand.u32 %v174, 2147483648
  %v186 = vsel %vm184, %v185, %v183
  %v187 = vmul.f32 %v11, %v170
  %v188 = vmul.f32 %v12, %v170
  %v189 = vsel %vm15, %v187, 0.0
  %190 = vadd.xlane.f32.xlu0 %v189
  %v191 = vpop.xlane.xlu0 %190
  %v192 = vsel %vm15, %v188, 0.0
  %193 = vadd.xlane.f32.xlu0 %v192
  %v194 = vpop.xlane.xlu0 %193
  %v195 = vmul.f32 %v33, %v186
  %v196 = vmul.f32 %v45, %v186
  %v197 = vmax.f32 %v195, 1e-08
  %v198 = vmax.f32 %v196, 1e-08
  %v199 = vrcp.pop %v197
  %v200 = vmul.f32 %v197, %v199
  %v201 = vsub.f32 1.0, %v200
  %v202 = vmul.f32 %v199, %v201
  %v203 = vadd.f32 %v199, %v202
  %vm204 = vweird.f32 %v197
  %vm205 = vweird.f32 %v199
  %vm206 = vmor %vm204, %vm205
  %v207 = vsel %vm206, %v199, %v203
  %v208 = vand.u32 2147483647, %v197
  %vm209 = vcmp.eq.f32.partialorder %v208, 8.507059e+37
  %v210 = vand.u32 %v197, 2147483648
  %v211 = vor.u32 1.1754944e-38, %v210
  %v212 = vsel %vm209, %v211, %v207
  %v213 = vmul.f32 %v191, %v212
  %v214 = vrcp.pop %v198
  %v215 = vmul.f32 %v198, %v214
  %v216 = vsub.f32 1.0, %v215
  %v217 = vmul.f32 %v214, %v216
  %v218 = vadd.f32 %v214, %v217
  %vm219 = vweird.f32 %v198
  %vm220 = vweird.f32 %v214
  %vm221 = vmor %vm219, %vm220
  %v222 = vsel %vm221, %v214, %v218
  %v223 = vand.u32 2147483647, %v198
  %vm224 = vcmp.eq.f32.partialorder %v223, 8.507059e+37
  %v225 = vand.u32 %v198, 2147483648
  %v226 = vor.u32 1.1754944e-38, %v225
  %v227 = vsel %vm224, %v226, %v222
  %v228 = vmul.f32 %v194, %v227
  %v229 = vadd.f32 %v167, %v213
  %v230 = vadd.f32 %v168, %v228
  %s231 = scalar_lea.vmem %s1, 24
  %v232 = vld [vmem:[%s231] sm:$0xff]
  %v233 = vmul.f32 %v232, %v232
  %v234 = vsel %vm15, %v233, 0.0
  %235 = vadd.xlane.f32.xlu0 %v234
  %v236 = vpop.xlane.xlu0 %235
  %v237 = vrsqrt.pop %v236
  %v238 = vmul.f32 %v237, %v236
  %v239 = vmul.f32 %v238, %v237
  %v240 = vmul.f32 0.5, %v239
  %v241 = vsub.f32 1.5, %v240
  %v242 = vmul.f32 %v237, %v241
  %v243 = vmul.f32 %v236, %v242
  %vm244 = vcmp.eq.f32.partialorder %v236, inf
  %v245 = vsel %vm244, %v236, %v243
  %vm246 = vcmp.eq.f32.partialorder %v236, 0.0
  %v247 = vand.u32 %v236, 2147483648
  %v248 = vsel %vm246, %v247, %v245
  %v249 = vmul.f32 %v11, %v232
  %v250 = vmul.f32 %v12, %v232
  %v251 = vsel %vm15, %v249, 0.0
  %252 = vadd.xlane.f32.xlu0 %v251
  %v253 = vpop.xlane.xlu0 %252
  %v254 = vsel %vm15, %v250, 0.0
  %255 = vadd.xlane.f32.xlu0 %v254
  %v256 = vpop.xlane.xlu0 %255
  %v257 = vmul.f32 %v33, %v248
  %v258 = vmul.f32 %v45, %v248
  %v259 = vmax.f32 %v257, 1e-08
  %v260 = vmax.f32 %v258, 1e-08
  %v261 = vrcp.pop %v259
  %v262 = vmul.f32 %v259, %v261
  %v263 = vsub.f32 1.0, %v262
  %v264 = vmul.f32 %v261, %v263
  %v265 = vadd.f32 %v261, %v264
  %vm266 = vweird.f32 %v259
  %vm267 = vweird.f32 %v261
  %vm268 = vmor %vm266, %vm267
  %v269 = vsel %vm268, %v261, %v265
  %v270 = vand.u32 2147483647, %v259
  %vm271 = vcmp.eq.f32.partialorder %v270, 8.507059e+37
  %v272 = vand.u32 %v259, 2147483648
  %v273 = vor.u32 1.1754944e-38, %v272
  %v274 = vsel %vm271, %v273, %v269
  %v275 = vmul.f32 %v253, %v274
  %v276 = vrcp.pop %v260
  %v277 = vmul.f32 %v260, %v276
  %v278 = vsub.f32 1.0, %v277
  %v279 = vmul.f32 %v276, %v278
  %v280 = vadd.f32 %v276, %v279
  %vm281 = vweird.f32 %v260
  %vm282 = vweird.f32 %v276
  %vm283 = vmor %vm281, %vm282
  %v284 = vsel %vm283, %v276, %v280
  %v285 = vand.u32 2147483647, %v260
  %vm286 = vcmp.eq.f32.partialorder %v285, 8.507059e+37
  %v287 = vand.u32 %v260, 2147483648
  %v288 = vor.u32 1.1754944e-38, %v287
  %v289 = vsel %vm286, %v288, %v284
  %v290 = vmul.f32 %v256, %v289
  %v291 = vadd.f32 %v229, %v275
  %v292 = vadd.f32 %v230, %v290
  %v293 = vrcp.pop 4.0
  %v294 = vmul.f32 4.0, %v293
  %v295 = vsub.f32 1.0, %v294
  %v296 = vmul.f32 %v293, %v295
  %v297 = vadd.f32 %v293, %v296
  %vm298 = vweird.f32 %v293
  %v299 = vsel %vm298, %v293, %v297
  %v300 = vmul.f32 %v291, %v299
  %v301 = vmul.f32 %v292, %v299
  %v302 = vadd.f32 %v300, 1.0
  %v303 = vadd.f32 %v301, 1.0
  %v304 = vmul.f32 %v302, 0.5
  %v305 = vmul.f32 %v303, 0.5
  %v306 = vsub.f32 %v304, 0.5
  %v307 = vsub.f32 %v305, 0.5
  %v308 = vmul.f32 %v306, 25.0
  %v309 = vmul.f32 %v307, 25.0
  %v310 = vtanh.pop %v308
  %v311 = vtanh.pop %v309
  %v312 = vmul.f32 %v310, 0.5
  %v313 = vmul.f32 %v311, 0.5
  %v314 = vadd.f32 %v312, 0.5
  %v315 = vadd.f32 %v313, 0.5
  %v318 = vlaneseq
  %v319 = vand.u32 %v318, 127
  %v320 = vperm.slane %v314, %v319
  %v321 = vperm.slane %v315, %v319
  %vm322 = vcmask 1041409
  %v323 = vsel %vm322, %v321, %v320
  %vm325 = vcmask 58368
  %326 = vst.msk [vmem:[%s2] sm:$0x3] %vm325, %v323
  // Predicated region
  $region10: #{trust_diffuser_net_forward.16} parent=0 // pred_check
    _
  $region11: #{trust_diffuser_net_forward.16} parent=0 // pred_check_branch
    %328 = sbr.rel (0) target = $region13
  $region12: #{trust_diffuser_net_forward.16} parent=0 // pred_region
    _
  $region13: #{trust_diffuser_net_forward.16} parent=0 // pred_fallthru
    _
  // Predicated region
  $region14: #{trust_diffuser_net_forward.16} parent=0 // pred_check
    _
  $region15: #{trust_diffuser_net_forward.16} parent=0 // pred_check_branch
    %330 = sbr.rel (0) target = $region17
  $region16: #{trust_diffuser_net_forward.16} parent=0 // pred_region
    _
  $region17: #{trust_diffuser_net_forward.16} parent=0 // pred_fallthru
    _

// kernel: trust_diffuser_net_forward.14
$region0: #{trust_diffuser_net_forward.14}
  #allocation0 [shape = 'u32[]', space=smem, size = 0x4, offset = 0x4, fixed_abs, tag = 'smem constant byte address 0x4 - core index']
  #allocation1 [shape = 'u32[72,128]{1,0:T(1,128)}', space=vmem, size = 0x9000, scoped, tag = 'internal scratch']
  %s0 = inlined_call_operand.vmem [shape: f32[16,32], index: 0, kind: input, shape index: {}]
  %s1 = inlined_call_operand.vmem [shape: bf16[32,8], index: 1, kind: input, shape index: {}]
  %s2 = inlined_call_operand.vmem [shape: f32[1,8], index: 2, kind: input, shape index: {}]
  %s3 = inlined_call_operand.vmem [shape: bf16[8,4], index: 3, kind: input, shape index: {}]
  %s4 = inlined_call_operand.vmem [shape: f32[1,4], index: 4, kind: input, shape index: {}]
  %s5 = inlined_call_operand.vmem [shape: f32[16,4], index: 5, kind: output, shape index: {}]
  %s6 = sld [smem:[#allocation0]]
  $region30: #{trust_diffuser_net_forward.14} parent=0
    _
  %s8 = ssub.s32 1, %s6
  %s9 = scalar_select 0, %s8, %s6
  // Predicated region
  $region2: #{trust_diffuser_net_forward.14} parent=0 // pred_check
    _
  $region3: #{trust_diffuser_net_forward.14} parent=0 // pred_check_branch
    %11 = sbr.rel (0) target = $region5
  $region4: #{trust_diffuser_net_forward.14} parent=0 // pred_region
    _
  $region5: #{trust_diffuser_net_forward.14} parent=0 // pred_fallthru
    _
  // Predicated region
  $region6: #{trust_diffuser_net_forward.14} parent=0 // pred_check
    _
  $region7: #{trust_diffuser_net_forward.14} parent=0 // pred_check_branch
    %13 = sbr.rel (0) target = $region9
  $region8: #{trust_diffuser_net_forward.14} parent=0 // pred_region
    _
  $region9: #{trust_diffuser_net_forward.14} parent=0 // pred_fallthru
    _
  // Predicated region
  $region10: #{trust_diffuser_net_forward.14} parent=0 // pred_check
    _
  $region11: #{trust_diffuser_net_forward.14} parent=0 // pred_check_branch
    %15 = sbr.rel (0) target = $region13
  $region12: #{trust_diffuser_net_forward.14} parent=0 // pred_region
    _
  $region13: #{trust_diffuser_net_forward.14} parent=0 // pred_fallthru
    _
  // Predicated region
  $region14: #{trust_diffuser_net_forward.14} parent=0 // pred_check
    _
  $region15: #{trust_diffuser_net_forward.14} parent=0 // pred_check_branch
    %17 = sbr.rel (0) target = $region17
  $region16: #{trust_diffuser_net_forward.14} parent=0 // pred_region
    _
  $region17: #{trust_diffuser_net_forward.14} parent=0 // pred_fallthru
    _
  // Predicated region
  $region18: #{trust_diffuser_net_forward.14} parent=0 // pred_check
    _
  $region19: #{trust_diffuser_net_forward.14} parent=0 // pred_check_branch
    %19 = sbr.rel (0) target = $region21
  $region20: #{trust_diffuser_net_forward.14} parent=0 // pred_region
    _
  $region21: #{trust_diffuser_net_forward.14} parent=0 // pred_fallthru
    _
  %v21 = vld [vmem:[%s0] sm:$0xff]
  %v22 = vld [vmem:[%s0 + $0x8] sm:$0xff]
  %v23 = vpack.c.bf16 %v22, %v21
  %v24 = vld [vmem:[%s1] sm:$0xf]
  %v25 = vld [vmem:[%s1 + $0x4] sm:$0xf]
  %v26 = vld [vmem:[%s1 + $0x8] sm:$0xf]
  %v27 = vld [vmem:[%s1 + $0xc] sm:$0xf]
  %v28 = vld [vmem:[%s2] sm:$0x1]
  %v30 = vperm.slane %v28, 0
  %v36 = vunpack.c.l.b16 %v24
  %v37 = vunpack.c.l.b16 %v25
  %v38 = vunpack.c.l.b16 %v26
  %v39 = vunpack.c.l.b16 %v27
  %v40 = vpack.c.b16 %v37, %v36
  %v41 = vpack.c.b16 %v39, %v38
  %vm44 = vcmask 261120
  %v46 = vsel %vm44, %v23, 0
  %48 = vmatpush.bf16.msra.mxu0 0
  %49 = vmatpush.bf16.msra.mxu0 0
  %50 = vmatpush.bf16.msra.mxu0 0
  %51 = vmatpush.bf16.msra.mxu0 0
  %52 = vmatpush.bf16.msra.mxu0 0
  %53 = vmatpush.bf16.msra.mxu0 0
  %54 = vmatpush.bf16.msra.mxu0 %v41
  %55 = vmatpush.bf16.msra.mxu0 %v40
  %56 = vmatmul.bf16.gmra.mxu0 %v46
  %v57 = vpop.f32.mrf.mxu0
  %v58 = vadd.f32 %v30, %v57
  %v59 = vpop.f32.mrf.mxu0
  %v60 = vadd.f32 %v30, %v59
  %61 = vdwg.mxu0
  %v62 = vmul.f32 %v58, 0.5
  %v63 = vmul.f32 %v60, 0.5
  %v64 = vmul.f32 %v58, 0.044715
  %v65 = vmul.f32 %v60, 0.044715
  %v66 = vmul.f32 %v64, %v58
  %v67 = vmul.f32 %v65, %v60
  %v68 = vmul.f32 %v66, %v58
  %v69 = vmul.f32 %v67, %v60
  %v70 = vadd.f32 %v58, %v68
  %v71 = vadd.f32 %v60, %v69
  %v72 = vmul.f32 %v70, 0.7978846
  %v73 = vmul.f32 %v71, 0.7978846
  %v74 = vtanh.pop %v72
  %v75 = vtanh.pop %v73
  %v76 = vadd.f32 %v74, 1.0
  %v77 = vadd.f32 %v75, 1.0
  %v78 = vmul.f32 %v62, %v76
  %v79 = vmul.f32 %v63, %v77
  %v80 = vpack.c.bf16 %v79, %v78
  %v81 = vld [vmem:[%s3] sm:$0xf]
  %v82 = vld [vmem:[%s4] sm:$0x1]
  %v84 = vperm.slane %v82, 0
  %vm86 = vcmask 64512
  %v88 = vsel %vm86, %v80, 0
  %vm90 = vcmask 1043456
  %v92 = vsel %vm90, %v81, 0
  %94 = vmatpush.bf16.msra.mxu0 0
  %95 = vmatpush.bf16.msra.mxu0 0
  %96 = vmatpush.bf16.msra.mxu0 0
  %97 = vmatpush.bf16.msra.mxu0 0
  %98 = vmatpush.bf16.msra.mxu0 0
  %99 = vmatpush.bf16.msra.mxu0 0
  %100 = vmatpush.bf16.msra.mxu0 0
  %101 = vmatpush.bf16.msra.mxu0 %v92
  %102 = vmatmul.bf16.gmra.mxu0 %v88
  %v103 = vpop.f32.mrf.mxu0
  %v104 = vadd.f32 %v84, %v103
  %v105 = vpop.f32.mrf.mxu0
  %v106 = vadd.f32 %v84, %v105
  %107 = vdwg.mxu0
  %vm108 = vcmask 31744
  %109 = vst.msk [vmem:[%s5] sm:$0xff] %vm108, %v104
  %110 = vst.msk [vmem:[%s5 + $0x8] sm:$0xff] %vm108, %v106
  // Predicated region
  $region22: #{trust_diffuser_net_forward.14} parent=0 // pred_check
    _
  $region23: #{trust_diffuser_net_forward.14} parent=0 // pred_check_branch
    %112 = sbr.rel (0) target = $region25
  $region24: #{trust_diffuser_net_forward.14} parent=0 // pred_region
    _
  $region25: #{trust_diffuser_net_forward.14} parent=0 // pred_fallthru
    _
  // Predicated region
  $region26: #{trust_diffuser_net_forward.14} parent=0 // pred_check
    _
  $region27: #{trust_diffuser_net_forward.14} parent=0 // pred_check_branch
    %114 = sbr.rel (0) target = $region29
  $region28: #{trust_diffuser_net_forward.14} parent=0 // pred_region
    _
  $region29: #{trust_diffuser_net_forward.14} parent=0 // pred_fallthru
    _

// kernel: trust_diffuser_net_forward.17
$region0: #{trust_diffuser_net_forward.17}
  #allocation0 [shape = 'u32[]', space=smem, size = 0x4, offset = 0x4, fixed_abs, tag = 'smem constant byte address 0x4 - core index']
  #allocation1 [shape = 'u32[72,128]{1,0:T(1,128)}', space=vmem, size = 0x9000, scoped, tag = 'internal scratch']
  %s0 = inlined_call_operand.vmem [shape: f32[32,32], index: 0, kind: input, shape index: {}]
  %s1 = inlined_call_operand.vmem [shape: bf16[32,32], index: 1, kind: input, shape index: {}]
  %s2 = inlined_call_operand.vmem [shape: bf16[32,32], index: 2, kind: output, shape index: {}]
  %s3 = sld [smem:[#allocation0]]
  $region18: #{trust_diffuser_net_forward.17} parent=0
    _
  %s5 = ssub.s32 1, %s3
  %s6 = scalar_select 0, %s5, %s3
  // Predicated region
  $region2: #{trust_diffuser_net_forward.17} parent=0 // pred_check
    _
  $region3: #{trust_diffuser_net_forward.17} parent=0 // pred_check_branch
    %8 = sbr.rel (0) target = $region5
  $region4: #{trust_diffuser_net_forward.17} parent=0 // pred_region
    _
  $region5: #{trust_diffuser_net_forward.17} parent=0 // pred_fallthru
    _
  // Predicated region
  $region6: #{trust_diffuser_net_forward.17} parent=0 // pred_check
    _
  $region7: #{trust_diffuser_net_forward.17} parent=0 // pred_check_branch
    %10 = sbr.rel (0) target = $region9
  $region8: #{trust_diffuser_net_forward.17} parent=0 // pred_region
    _
  $region9: #{trust_diffuser_net_forward.17} parent=0 // pred_fallthru
    _
  %v12 = vld [vmem:[%s0] sm:$0xff]
  %v13 = vld [vmem:[%s0 + $0x8] sm:$0xff]
  %v14 = vld [vmem:[%s0 + $0x10] sm:$0xff]
  %v15 = vld [vmem:[%s0 + $0x18] sm:$0xff]
  %v16 = vpack.c.bf16 %v13, %v12
  %v17 = vpack.c.bf16 %v15, %v14
  %v18 = vld [vmem:[%s1] sm:$0xf]
  %v19 = vld [vmem:[%s1 + $0x4] sm:$0xf]
  %v20 = vld [vmem:[%s1 + $0x8] sm:$0xf]
  %v21 = vld [vmem:[%s1 + $0xc] sm:$0xf]
  %v26 = vunpack.c.l.b16 %v18
  %v27 = vunpack.c.l.b16 %v19
  %v28 = vunpack.c.l.b16 %v20
  %v29 = vunpack.c.l.b16 %v21
  %v30 = vpack.c.b16 %v27, %v26
  %v31 = vpack.c.b16 %v29, %v28
  %vm34 = vcmask 261120
  %v36 = vsel %vm34, %v16, 0
  %v39 = vsel %vm34, %v17, 0
  %41 = vmatpush.bf16.msra.mxu0 0
  %42 = vmatpush.bf16.msra.mxu0 0
  %43 = vmatpush.bf16.msra.mxu0 0
  %44 = vmatpush.bf16.msra.mxu0 0
  %45 = vmatpush.bf16.msra.mxu0 0
  %46 = vmatpush.bf16.msra.mxu0 0
  %47 = vmatpush.bf16.msra.mxu0 %v31
  %48 = vmatpush.bf16.msra.mxu0 %v30
  %49 = vmatmul.bf16.gmra.mxu0 %v36
  %v50 = vpop.f32.mrf.mxu0
  %v51 = vadd.f32 0.0, %v50
  %v52 = vpop.f32.mrf.mxu0
  %v53 = vadd.f32 0.0, %v52
  %54 = vmatmul.bf16.gmra.mxu0 %v39
  %v55 = vpop.f32.mrf.mxu0
  %v56 = vadd.f32 0.0, %v55
  %v57 = vpop.f32.mrf.mxu0
  %v58 = vadd.f32 0.0, %v57
  %59 = vdwg.mxu0
  %v60 = vpack.c.bf16 %v51, %v51
  %v61 = vpack.c.bf16 %v53, %v53
  %v62 = vpack.c.bf16 %v56, %v56
  %v63 = vpack.c.bf16 %v58, %v58
  %vm64 = vcmask 257024
  %65 = vst.msk [vmem:[%s2] sm:$0xf] %vm64, %v60
  %66 = vst.msk [vmem:[%s2 + $0x4] sm:$0xf] %vm64, %v61
  %67 = vst.msk [vmem:[%s2 + $0x8] sm:$0xf] %vm64, %v62
  %68 = vst.msk [vmem:[%s2 + $0xc] sm:$0xf] %vm64, %v63
  // Predicated region
  $region10: #{trust_diffuser_net_forward.17} parent=0 // pred_check
    _
  $region11: #{trust_diffuser_net_forward.17} parent=0 // pred_check_branch
    %70 = sbr.rel (0) target = $region13
  $region12: #{trust_diffuser_net_forward.17} parent=0 // pred_region
    _
  $region13: #{trust_diffuser_net_forward.17} parent=0 // pred_fallthru
    _
  // Predicated region
  $region14: #{trust_diffuser_net_forward.17} parent=0 // pred_check
    _
  $region15: #{trust_diffuser_net_forward.17} parent=0 // pred_check_branch
    %72 = sbr.rel (0) target = $region17
  $region16: #{trust_diffuser_net_forward.17} parent=0 // pred_region
    _
  $region17: #{trust_diffuser_net_forward.17} parent=0 // pred_fallthru
    _

// kernel: trust_diffuser_net_forward.15
$region0: #{trust_diffuser_net_forward.15}
  #allocation0 [shape = 'u32[]', space=smem, size = 0x4, offset = 0x4, fixed_abs, tag = 'smem constant byte address 0x4 - core index']
  #allocation1 [shape = 'u32[72,128]{1,0:T(1,128)}', space=vmem, size = 0x9000, scoped, tag = 'internal scratch']
  %s0 = inlined_call_operand.vmem [shape: f32[32,32], index: 0, kind: input, shape index: {}]
  %s1 = inlined_call_operand.vmem [shape: bf16[32,8], index: 1, kind: input, shape index: {}]
  %s2 = inlined_call_operand.vmem [shape: f32[1,8], index: 2, kind: input, shape index: {}]
  %s3 = inlined_call_operand.vmem [shape: bf16[8,4], index: 3, kind: input, shape index: {}]
  %s4 = inlined_call_operand.vmem [shape: f32[1,4], index: 4, kind: input, shape index: {}]
  %s5 = inlined_call_operand.vmem [shape: f32[32,4], index: 5, kind: output, shape index: {}]
  %s6 = sld [smem:[#allocation0]]
  $region30: #{trust_diffuser_net_forward.15} parent=0
    _
  %s8 = ssub.s32 1, %s6
  %s9 = scalar_select 0, %s8, %s6
  // Predicated region
  $region2: #{trust_diffuser_net_forward.15} parent=0 // pred_check
    _
  $region3: #{trust_diffuser_net_forward.15} parent=0 // pred_check_branch
    %11 = sbr.rel (0) target = $region5
  $region4: #{trust_diffuser_net_forward.15} parent=0 // pred_region
    _
  $region5: #{trust_diffuser_net_forward.15} parent=0 // pred_fallthru
    _
  // Predicated region
  $region6: #{trust_diffuser_net_forward.15} parent=0 // pred_check
    _
  $region7: #{trust_diffuser_net_forward.15} parent=0 // pred_check_branch
    %13 = sbr.rel (0) target = $region9
  $region8: #{trust_diffuser_net_forward.15} parent=0 // pred_region
    _
  $region9: #{trust_diffuser_net_forward.15} parent=0 // pred_fallthru
    _
  // Predicated region
  $region10: #{trust_diffuser_net_forward.15} parent=0 // pred_check
    _
  $region11: #{trust_diffuser_net_forward.15} parent=0 // pred_check_branch
    %15 = sbr.rel (0) target = $region13
  $region12: #{trust_diffuser_net_forward.15} parent=0 // pred_region
    _
  $region13: #{trust_diffuser_net_forward.15} parent=0 // pred_fallthru
    _
  // Predicated region
  $region14: #{trust_diffuser_net_forward.15} parent=0 // pred_check
    _
  $region15: #{trust_diffuser_net_forward.15} parent=0 // pred_check_branch
    %17 = sbr.rel (0) target = $region17
  $region16: #{trust_diffuser_net_forward.15} parent=0 // pred_region
    _
  $region17: #{trust_diffuser_net_forward.15} parent=0 // pred_fallthru
    _
  // Predicated region
  $region18: #{trust_diffuser_net_forward.15} parent=0 // pred_check
    _
  $region19: #{trust_diffuser_net_forward.15} parent=0 // pred_check_branch
    %19 = sbr.rel (0) target = $region21
  $region20: #{trust_diffuser_net_forward.15} parent=0 // pred_region
    _
  $region21: #{trust_diffuser_net_forward.15} parent=0 // pred_fallthru
    _
  %v21 = vld [vmem:[%s0] sm:$0xff]
  %v22 = vld [vmem:[%s0 + $0x8] sm:$0xff]
  %v23 = vld [vmem:[%s0 + $0x10] sm:$0xff]
  %v24 = vld [vmem:[%s0 + $0x18] sm:$0xff]
  %v25 = vpack.c.bf16 %v22, %v21
  %v26 = vpack.c.bf16 %v24, %v23
  %v27 = vld [vmem:[%s1] sm:$0xf]
  %v28 = vld [vmem:[%s1 + $0x4] sm:$0xf]
  %v29 = vld [vmem:[%s1 + $0x8] sm:$0xf]
  %v30 = vld [vmem:[%s1 + $0xc] sm:$0xf]
  %v31 = vld [vmem:[%s2] sm:$0x1]
  %v33 = vperm.slane %v31, 0
  %v39 = vunpack.c.l.b16 %v27
  %v40 = vunpack.c.l.b16 %v28
  %v41 = vunpack.c.l.b16 %v29
  %v42 = vunpack.c.l.b16 %v30
  %v43 = vpack.c.b16 %v40, %v39
  %v44 = vpack.c.b16 %v42, %v41
  %vm47 = vcmask 261120
  %v49 = vsel %vm47, %v25, 0
  %v52 = vsel %vm47, %v26, 0
  %54 = vmatpush.bf16.msra.mxu0 0
  %55 = vmatpush.bf16.msra.mxu0 0
  %56 = vmatpush.bf16.msra.mxu0 0
  %57 = vmatpush.bf16.msra.mxu0 0
  %58 = vmatpush.bf16.msra.mxu0 0
  %59 = vmatpush.bf16.msra.mxu0 0
  %60 = vmatpush.bf16.msra.mxu0 %v44
  %61 = vmatpush.bf16.msra.mxu0 %v43
  %62 = vmatmul.bf16.gmra.mxu0 %v49
  %v63 = vpop.f32.mrf.mxu0
  %v64 = vadd.f32 %v33, %v63
  %v65 = vpop.f32.mrf.mxu0
  %v66 = vadd.f32 %v33, %v65
  %67 = vmatmul.bf16.gmra.mxu0 %v52
  %v68 = vpop.f32.mrf.mxu0
  %v69 = vadd.f32 %v33, %v68
  %v70 = vpop.f32.mrf.mxu0
  %v71 = vadd.f32 %v33, %v70
  %72 = vdwg.mxu0
  %v73 = vmul.f32 %v64, 0.5
  %v74 = vmul.f32 %v66, 0.5
  %v75 = vmul.f32 %v69, 0.5
  %v76 = vmul.f32 %v71, 0.5
  %v77 = vmul.f32 %v64, 0.044715
  %v78 = vmul.f32 %v66, 0.044715
  %v79 = vmul.f32 %v69, 0.044715
  %v80 = vmul.f32 %v71, 0.044715
  %v81 = vmul.f32 %v77, %v64
  %v82 = vmul.f32 %v78, %v66
  %v83 = vmul.f32 %v79, %v69
  %v84 = vmul.f32 %v80, %v71
  %v85 = vmul.f32 %v81, %v64
  %v86 = vmul.f32 %v82, %v66
  %v87 = vmul.f32 %v83, %v69
  %v88 = vmul.f32 %v84, %v71
  %v89 = vadd.f32 %v64, %v85
  %v90 = vadd.f32 %v66, %v86
  %v91 = vadd.f32 %v69, %v87
  %v92 = vadd.f32 %v71, %v88
  %v93 = vmul.f32 %v89, 0.7978846
  %v94 = vmul.f32 %v90, 0.7978846
  %v95 = vmul.f32 %v91, 0.7978846
  %v96 = vmul.f32 %v92, 0.7978846
  %v97 = vtanh.pop %v93
  %v98 = vtanh.pop %v94
  %v99 = vtanh.pop %v95
  %v100 = vtanh.pop %v96
  %v101 = vadd.f32 %v97, 1.0
  %v102 = vadd.f32 %v98, 1.0
  %v103 = vadd.f32 %v99, 1.0
  %v104 = vadd.f32 %v100, 1.0
  %v105 = vmul.f32 %v73, %v101
  %v106 = vmul.f32 %v74, %v102
  %v107 = vmul.f32 %v75, %v103
  %v108 = vmul.f32 %v76, %v104
  %v109 = vpack.c.bf16 %v106, %v105
  %v110 = vpack.c.bf16 %v108, %v107
  %v111 = vld [vmem:[%s3] sm:$0xf]
  %v112 = vld [vmem:[%s4] sm:$0x1]
  %v114 = vperm.slane %v112, 0
  %vm116 = vcmask 64512
  %v118 = vsel %vm116, %v109, 0
  %v121 = vsel %vm116, %v110, 0
  %vm123 = vcmask 1043456
  %v125 = vsel %vm123, %v111, 0
  %127 = vmatpush.bf16.msra.mxu0 0
  %128 = vmatpush.bf16.msra.mxu0 0
  %129 = vmatpush.bf16.msra.mxu0 0
  %130 = vmatpush.bf16.msra.mxu0 0
  %131 = vmatpush.bf16.msra.mxu0 0
  %132 = vmatpush.bf16.msra.mxu0 0
  %133 = vmatpush.bf16.msra.mxu0 0
  %134 = vmatpush.bf16.msra.mxu0 %v125
  %135 = vmatmul.bf16.gmra.mxu0 %v118
  %v136 = vpop.f32.mrf.mxu0
  %v137 = vadd.f32 %v114, %v136
  %v138 = vpop.f32.mrf.mxu0
  %v139 = vadd.f32 %v114, %v138
  %140 = vmatmul.bf16.gmra.mxu0 %v121
  %v141 = vpop.f32.mrf.mxu0
  %v142 = vadd.f32 %v114, %v141
  %v143 = vpop.f32.mrf.mxu0
  %v144 = vadd.f32 %v114, %v143
  %145 = vdwg.mxu0
  %vm146 = vcmask 31744
  %147 = vst.msk [vmem:[%s5] sm:$0xff] %vm146, %v137
  %148 = vst.msk [vmem:[%s5 + $0x8] sm:$0xff] %vm146, %v139
  %149 = vst.msk [vmem:[%s5 + $0x10] sm:$0xff] %vm146, %v142
  %150 = vst.msk [vmem:[%s5 + $0x18] sm:$0xff] %vm146, %v144
  // Predicated region
  $region22: #{trust_diffuser_net_forward.15} parent=0 // pred_check
    _
  $region23: #{trust_diffuser_net_forward.15} parent=0 // pred_check_branch
    %152 = sbr.rel (0) target = $region25
  $region24: #{trust_diffuser_net_forward.15} parent=0 // pred_region
    _
  $region25: #{trust_diffuser_net_forward.15} parent=0 // pred_fallthru
    _
  // Predicated region
  $region26: #{trust_diffuser_net_forward.15} parent=0 // pred_check
    _
  $region27: #{trust_diffuser_net_forward.15} parent=0 // pred_check_branch
    %154 = sbr.rel (0) target = $region29
  $region28: #{trust_diffuser_net_forward.15} parent=0 // pred_region
    _
  $region29: #{trust_diffuser_net_forward.15} parent=0 // pred_fallthru
    _

// kernel: trust_diffuser_net_forward.18
$region0: #{trust_diffuser_net_forward.18}
  #allocation0 [shape = 'u32[]', space=smem, size = 0x4, offset = 0x4, fixed_abs, tag = 'smem constant byte address 0x4 - core index']
  #allocation1 [shape = 'u32[72,128]{1,0:T(1,128)}', space=vmem, size = 0x9000, scoped, tag = 'internal scratch']
  %s0 = inlined_call_operand.vmem [shape: f32[16,32], index: 0, kind: input, shape index: {}]
  %s1 = inlined_call_operand.vmem [shape: f32[16,1], index: 1, kind: input, shape index: {}]
  %s2 = inlined_call_operand.vmem [shape: bf16[32,64], index: 2, kind: input, shape index: {}]
  %s3 = inlined_call_operand.vmem [shape: bf16[16,64], index: 3, kind: output, shape index: {}]
  %s4 = sld [smem:[#allocation0]]
  $region22: #{trust_diffuser_net_forward.18} parent=0
    _
  %s6 = ssub.s32 1, %s4
  %s7 = scalar_select 0, %s6, %s4
  // Predicated region
  $region2: #{trust_diffuser_net_forward.18} parent=0 // pred_check
    _
  $region3: #{trust_diffuser_net_forward.18} parent=0 // pred_check_branch
    %9 = sbr.rel (0) target = $region5
  $region4: #{trust_diffuser_net_forward.18} parent=0 // pred_region
    _
  $region5: #{trust_diffuser_net_forward.18} parent=0 // pred_fallthru
    _
  // Predicated region
  $region6: #{trust_diffuser_net_forward.18} parent=0 // pred_check
    _
  $region7: #{trust_diffuser_net_forward.18} parent=0 // pred_check_branch
    %11 = sbr.rel (0) target = $region9
  $region8: #{trust_diffuser_net_forward.18} parent=0 // pred_region
    _
  $region9: #{trust_diffuser_net_forward.18} parent=0 // pred_fallthru
    _
  // Predicated region
  $region10: #{trust_diffuser_net_forward.18} parent=0 // pred_check
    _
  $region11: #{trust_diffuser_net_forward.18} parent=0 // pred_check_branch
    %13 = sbr.rel (0) target = $region13
  $region12: #{trust_diffuser_net_forward.18} parent=0 // pred_region
    _
  $region13: #{trust_diffuser_net_forward.18} parent=0 // pred_fallthru
    _
  %v15 = vld [vmem:[%s0] sm:$0xff]
  %v16 = vld [vmem:[%s0 + $0x8] sm:$0xff]
  %v17 = vld [vmem:[%s1] sm:$0xff]
  %v18 = vld [vmem:[%s1 + $0x8] sm:$0xff]
  %20 = vset.pattern.permute.xlu0 0
  %21 = vperm.xlu0 %20, %v17
  %v22 = vpop.permute.xlu0 %21
  %25 = vset.pattern.permute.xlu0 0
  %26 = vperm.xlu0 %25, %v18
  %v27 = vpop.permute.xlu0 %26
  %v29 = vmul.f32 %v15, %v22
  %v30 = vmul.f32 %v16, %v27
  %v31 = vpack.c.bf16 %v30, %v29
  %v32 = vld [vmem:[%s2] sm:$0xf]
  %v33 = vld [vmem:[%s2 + $0x4] sm:$0xf]
  %v34 = vld [vmem:[%s2 + $0x8] sm:$0xf]
  %v35 = vld [vmem:[%s2 + $0xc] sm:$0xf]
  %v40 = vunpack.c.l.b16 %v32
  %v41 = vunpack.c.l.b16 %v33
  %v42 = vunpack.c.l.b16 %v34
  %v43 = vunpack.c.l.b16 %v35
  %v44 = vpack.c.b16 %v41, %v40
  %v45 = vpack.c.b16 %v43, %v42
  %vm48 = vcmask 261120
  %v50 = vsel %vm48, %v31, 0
  %52 = vmatpush.bf16.msra.mxu0 0
  %53 = vmatpush.bf16.msra.mxu0 0
  %54 = vmatpush.bf16.msra.mxu0 0
  %55 = vmatpush.bf16.msra.mxu0 0
  %56 = vmatpush.bf16.msra.mxu0 0
  %57 = vmatpush.bf16.msra.mxu0 0
  %58 = vmatpush.bf16.msra.mxu0 %v45
  %59 = vmatpush.bf16.msra.mxu0 %v44
  %60 = vmatmul.bf16.gmra.mxu0 %v50
  %v61 = vpop.f32.mrf.mxu0
  %v62 = vadd.f32 0.0, %v61
  %v63 = vpop.f32.mrf.mxu0
  %v64 = vadd.f32 0.0, %v63
  %65 = vdwg.mxu0
  %v66 = vpack.c.bf16 %v62, %v62
  %v67 = vpack.c.bf16 %v64, %v64
  %vm68 = vcmask 519168
  %69 = vst.msk [vmem:[%s3] sm:$0xf] %vm68, %v66
  %70 = vst.msk [vmem:[%s3 + $0x4] sm:$0xf] %vm68, %v67
  // Predicated region
  $region14: #{trust_diffuser_net_forward.18} parent=0 // pred_check
    _
  $region15: #{trust_diffuser_net_forward.18} parent=0 // pred_check_branch
    %72 = sbr.rel (0) target = $region17
  $region16: #{trust_diffuser_net_forward.18} parent=0 // pred_region
    _
  $region17: #{trust_diffuser_net_forward.18} parent=0 // pred_fallthru
    _
  // Predicated region
  $region18: #{trust_diffuser_net_forward.18} parent=0 // pred_check
    _
  $region19: #{trust_diffuser_net_forward.18} parent=0 // pred_check_branch
    %74 = sbr.rel (0) target = $region21
  $region20: #{trust_diffuser_net_forward.18} parent=0 // pred_region
    _
  $region21: #{trust_diffuser_net_forward.18} parent=0 // pred_fallthru
    _

// kernel: trust_diffuser_net_forward.21
$region0: #{trust_diffuser_net_forward.21}
  #allocation0 [shape = 'u32[]', space=smem, size = 0x4, offset = 0x4, fixed_abs, tag = 'smem constant byte address 0x4 - core index']
  #allocation1 [shape = 'u32[72,128]{1,0:T(1,128)}', space=vmem, size = 0x9000, scoped, tag = 'internal scratch']
  %s0 = inlined_call_operand.vmem [shape: f32[16,32], index: 0, kind: input, shape index: {}]
  %s1 = inlined_call_operand.vmem [shape: bf16[32,64], index: 1, kind: input, shape index: {}]
  %s2 = inlined_call_operand.vmem [shape: bf16[16,64], index: 2, kind: output, shape index: {}]
  %s3 = sld [smem:[#allocation0]]
  $region18: #{trust_diffuser_net_forward.21} parent=0
    _
  %s5 = ssub.s32 1, %s3
  %s6 = scalar_select 0, %s5, %s3
  // Predicated region
  $region2: #{trust_diffuser_net_forward.21} parent=0 // pred_check
    _
  $region3: #{trust_diffuser_net_forward.21} parent=0 // pred_check_branch
    %8 = sbr.rel (0) target = $region5
  $region4: #{trust_diffuser_net_forward.21} parent=0 // pred_region
    _
  $region5: #{trust_diffuser_net_forward.21} parent=0 // pred_fallthru
    _
  // Predicated region
  $region6: #{trust_diffuser_net_forward.21} parent=0 // pred_check
    _
  $region7: #{trust_diffuser_net_forward.21} parent=0 // pred_check_branch
    %10 = sbr.rel (0) target = $region9
  $region8: #{trust_diffuser_net_forward.21} parent=0 // pred_region
    _
  $region9: #{trust_diffuser_net_forward.21} parent=0 // pred_fallthru
    _
  %v12 = vld [vmem:[%s0] sm:$0xff]
  %v13 = vld [vmem:[%s0 + $0x8] sm:$0xff]
  %v14 = vpack.c.bf16 %v13, %v12
  %v15 = vld [vmem:[%s1] sm:$0xf]
  %v16 = vld [vmem:[%s1 + $0x4] sm:$0xf]
  %v17 = vld [vmem:[%s1 + $0x8] sm:$0xf]
  %v18 = vld [vmem:[%s1 + $0xc] sm:$0xf]
  %v23 = vunpack.c.l.b16 %v15
  %v24 = vunpack.c.l.b16 %v16
  %v25 = vunpack.c.l.b16 %v17
  %v26 = vunpack.c.l.b16 %v18
  %v27 = vpack.c.b16 %v24, %v23
  %v28 = vpack.c.b16 %v26, %v25
  %vm31 = vcmask 261120
  %v33 = vsel %vm31, %v14, 0
  %35 = vmatpush.bf16.msra.mxu0 0
  %36 = vmatpush.bf16.msra.mxu0 0
  %37 = vmatpush.bf16.msra.mxu0 0
  %38 = vmatpush.bf16.msra.mxu0 0
  %39 = vmatpush.bf16.msra.mxu0 0
  %40 = vmatpush.bf16.msra.mxu0 0
  %41 = vmatpush.bf16.msra.mxu0 %v28
  %42 = vmatpush.bf16.msra.mxu0 %v27
  %43 = vmatmul.bf16.gmra.mxu0 %v33
  %v44 = vpop.f32.mrf.mxu0
  %v45 = vadd.f32 0.0, %v44
  %v46 = vpop.f32.mrf.mxu0
  %v47 = vadd.f32 0.0, %v46
  %48 = vdwg.mxu0
  %v49 = vpack.c.bf16 %v45, %v45
  %v50 = vpack.c.bf16 %v47, %v47
  %vm51 = vcmask 519168
  %52 = vst.msk [vmem:[%s2] sm:$0xf] %vm51, %v49
  %53 = vst.msk [vmem:[%s2 + $0x4] sm:$0xf] %vm51, %v50
  // Predicated region
  $region10: #{trust_diffuser_net_forward.21} parent=0 // pred_check
    _
  $region11: #{trust_diffuser_net_forward.21} parent=0 // pred_check_branch
    %55 = sbr.rel (0) target = $region13
  $region12: #{trust_diffuser_net_forward.21} parent=0 // pred_region
    _
  $region13: #{trust_diffuser_net_forward.21} parent=0 // pred_fallthru
    _
  // Predicated region
  $region14: #{trust_diffuser_net_forward.21} parent=0 // pred_check
    _
  $region15: #{trust_diffuser_net_forward.21} parent=0 // pred_check_branch
    %57 = sbr.rel (0) target = $region17
  $region16: #{trust_diffuser_net_forward.21} parent=0 // pred_region
    _
  $region17: #{trust_diffuser_net_forward.21} parent=0 // pred_fallthru
    _

// kernel: trust_diffuser_net_forward.20
$region0: #{trust_diffuser_net_forward.20}
  #allocation0 [shape = 'u32[]', space=smem, size = 0x4, offset = 0x4, fixed_abs, tag = 'smem constant byte address 0x4 - core index']
  #allocation1 [shape = 'u32[72,128]{1,0:T(1,128)}', space=vmem, size = 0x9000, scoped, tag = 'internal scratch']
  %s0 = inlined_call_operand.vmem [shape: f32[16,32], index: 0, kind: input, shape index: {}]
  %s1 = inlined_call_operand.vmem [shape: bf16[32,32], index: 1, kind: input, shape index: {}]
  %s2 = inlined_call_operand.vmem [shape: f32[1,32], index: 2, kind: input, shape index: {}]
  %s3 = inlined_call_operand.vmem [shape: f32[1,32], index: 3, kind: input, shape index: {}]
  %s4 = inlined_call_operand.vmem [shape: f32[1,32], index: 4, kind: input, shape index: {}]
  %s5 = inlined_call_operand.vmem [shape: f32[16,32], index: 5, kind: output, shape index: {}]
  %s6 = sld [smem:[#allocation0]]
  $region30: #{trust_diffuser_net_forward.20} parent=0
    _
  %s8 = ssub.s32 1, %s6
  %s9 = scalar_select 0, %s8, %s6
  // Predicated region
  $region2: #{trust_diffuser_net_forward.20} parent=0 // pred_check
    _
  $region3: #{trust_diffuser_net_forward.20} parent=0 // pred_check_branch
    %11 = sbr.rel (0) target = $region5
  $region4: #{trust_diffuser_net_forward.20} parent=0 // pred_region
    _
  $region5: #{trust_diffuser_net_forward.20} parent=0 // pred_fallthru
    _
  // Predicated region
  $region6: #{trust_diffuser_net_forward.20} parent=0 // pred_check
    _
  $region7: #{trust_diffuser_net_forward.20} parent=0 // pred_check_branch
    %13 = sbr.rel (0) target = $region9
  $region8: #{trust_diffuser_net_forward.20} parent=0 // pred_region
    _
  $region9: #{trust_diffuser_net_forward.20} parent=0 // pred_fallthru
    _
  // Predicated region
  $region10: #{trust_diffuser_net_forward.20} parent=0 // pred_check
    _
  $region11: #{trust_diffuser_net_forward.20} parent=0 // pred_check_branch
    %15 = sbr.rel (0) target = $region13
  $region12: #{trust_diffuser_net_forward.20} parent=0 // pred_region
    _
  $region13: #{trust_diffuser_net_forward.20} parent=0 // pred_fallthru
    _
  // Predicated region
  $region14: #{trust_diffuser_net_forward.20} parent=0 // pred_check
    _
  $region15: #{trust_diffuser_net_forward.20} parent=0 // pred_check_branch
    %17 = sbr.rel (0) target = $region17
  $region16: #{trust_diffuser_net_forward.20} parent=0 // pred_region
    _
  $region17: #{trust_diffuser_net_forward.20} parent=0 // pred_fallthru
    _
  // Predicated region
  $region18: #{trust_diffuser_net_forward.20} parent=0 // pred_check
    _
  $region19: #{trust_diffuser_net_forward.20} parent=0 // pred_check_branch
    %19 = sbr.rel (0) target = $region21
  $region20: #{trust_diffuser_net_forward.20} parent=0 // pred_region
    _
  $region21: #{trust_diffuser_net_forward.20} parent=0 // pred_fallthru
    _
  %v21 = vld [vmem:[%s0] sm:$0xff]
  %v22 = vld [vmem:[%s0 + $0x8] sm:$0xff]
  %v23 = vpack.c.bf16 %v22, %v21
  %v24 = vld [vmem:[%s1] sm:$0xf]
  %v25 = vld [vmem:[%s1 + $0x4] sm:$0xf]
  %v26 = vld [vmem:[%s1 + $0x8] sm:$0xf]
  %v27 = vld [vmem:[%s1 + $0xc] sm:$0xf]
  %v28 = vld [vmem:[%s2] sm:$0x1]
  %v30 = vperm.slane %v28, 0
  %v36 = vunpack.c.l.b16 %v24
  %v37 = vunpack.c.l.b16 %v25
  %v38 = vunpack.c.l.b16 %v26
  %v39 = vunpack.c.l.b16 %v27
  %v40 = vpack.c.b16 %v37, %v36
  %v41 = vpack.c.b16 %v39, %v38
  %vm44 = vcmask 261120
  %v46 = vsel %vm44, %v23, 0
  %48 = vmatpush.bf16.msra.mxu0 0
  %49 = vmatpush.bf16.msra.mxu0 0
  %50 = vmatpush.bf16.msra.mxu0 0
  %51 = vmatpush.bf16.msra.mxu0 0
  %52 = vmatpush.bf16.msra.mxu0 0
  %53 = vmatpush.bf16.msra.mxu0 0
  %54 = vmatpush.bf16.msra.mxu0 %v41
  %55 = vmatpush.bf16.msra.mxu0 %v40
  %56 = vmatmul.bf16.gmra.mxu0 %v46
  %v57 = vpop.f32.mrf.mxu0
  %v58 = vadd.f32 %v30, %v57
  %v59 = vpop.f32.mrf.mxu0
  %v60 = vadd.f32 %v30, %v59
  %61 = vdwg.mxu0
  %v62 = vsel %vm44, %v58, 0.0
  %63 = vadd.xlane.f32.xlu0 %v62
  %v64 = vpop.xlane.xlu0 %63
  %v65 = vsel %vm44, %v60, 0.0
  %66 = vadd.xlane.f32.xlu0 %v65
  %v67 = vpop.xlane.xlu0 %66
  %v68 = vrcp.pop 32.0
  %v69 = vmul.f32 32.0, %v68
  %v70 = vsub.f32 1.0, %v69
  %v71 = vmul.f32 %v68, %v70
  %v72 = vadd.f32 %v68, %v71
  %vm73 = vweird.f32 %v68
  %v74 = vsel %vm73, %v68, %v72
  %v75 = vmul.f32 %v64, %v74
  %v76 = vmul.f32 %v67, %v74
  %v77 = vsub.f32 %v58, %v75
  %v78 = vsub.f32 %v60, %v76
  %v79 = vmul.f32 %v77, %v77
  %v80 = vmul.f32 %v78, %v78
  %v81 = vsel %vm44, %v79, 0.0
  %82 = vadd.xlane.f32.xlu0 %v81
  %v83 = vpop.xlane.xlu0 %82
  %v84 = vsel %vm44, %v80, 0.0
  %85 = vadd.xlane.f32.xlu0 %v84
  %v86 = vpop.xlane.xlu0 %85
  %v87 = vmul.f32 %v83, %v74
  %v88 = vmul.f32 %v86, %v74
  %v89 = vadd.f32 %v87, 1e-05
  %v90 = vadd.f32 %v88, 1e-05
  %v91 = vrsqrt.pop %v89
  %v92 = vmul.f32 %v91, %v89
  %v93 = vmul.f32 %v92, %v91
  %v94 = vmul.f32 0.5, %v93
  %v95 = vsub.f32 1.5, %v94
  %v96 = vmul.f32 %v91, %v95
  %vm97 = vweird.f32 %v89
  %vm98 = vweird.f32 %v91
  %vm99 = vmor %vm97, %vm98
  %v100 = vsel %vm99, %v91, %v96
  %v101 = vrsqrt.pop %v90
  %v102 = vmul.f32 %v101, %v90
  %v103 = vmul.f32 %v102, %v101
  %v104 = vmul.f32 0.5, %v103
  %v105 = vsub.f32 1.5, %v104
  %v106 = vmul.f32 %v101, %v105
  %vm107 = vweird.f32 %v90
  %vm108 = vweird.f32 %v101
  %vm109 = vmor %vm107, %vm108
  %v110 = vsel %vm109, %v101, %v106
  %v111 = vmul.f32 %v77, %v100
  %v112 = vmul.f32 %v78, %v110
  %v113 = vld [vmem:[%s3] sm:$0x1]
  %v115 = vperm.slane %v113, 0
  %v117 = vmul.f32 %v111, %v115
  %v118 = vmul.f32 %v112, %v115
  %v119 = vld [vmem:[%s4] sm:$0x1]
  %v121 = vperm.slane %v119, 0
  %v123 = vadd.f32 %v117, %v121
  %v124 = vadd.f32 %v118, %v121
  %125 = vst.msk [vmem:[%s5] sm:$0xff] %vm44, %v123
  %126 = vst.msk [vmem:[%s5 + $0x8] sm:$0xff] %vm44, %v124
  // Predicated region
  $region22: #{trust_diffuser_net_forward.20} parent=0 // pred_check
    _
  $region23: #{trust_diffuser_net_forward.20} parent=0 // pred_check_branch
    %128 = sbr.rel (0) target = $region25
  $region24: #{trust_diffuser_net_forward.20} parent=0 // pred_region
    _
  $region25: #{trust_diffuser_net_forward.20} parent=0 // pred_fallthru
    _
  // Predicated region
  $region26: #{trust_diffuser_net_forward.20} parent=0 // pred_check
    _
  $region27: #{trust_diffuser_net_forward.20} parent=0 // pred_check_branch
    %130 = sbr.rel (0) target = $region29
  $region28: #{trust_diffuser_net_forward.20} parent=0 // pred_region
    _
  $region29: #{trust_diffuser_net_forward.20} parent=0 // pred_fallthru
    _

// kernel: trust_diffuser_net_forward.19
$region0: #{trust_diffuser_net_forward.19}
  #allocation0 [shape = 'u32[]', space=smem, size = 0x4, offset = 0x4, fixed_abs, tag = 'smem constant byte address 0x4 - core index']
  #allocation1 [shape = 'u32[72,128]{1,0:T(1,128)}', space=vmem, size = 0x9000, scoped, tag = 'internal scratch']
  %s0 = inlined_call_operand.vmem [shape: bf16[2,8,64], index: 0, kind: input, shape index: {}]
  %s1 = inlined_call_operand.vmem [shape: bf16[4,8,32], index: 1, kind: input, shape index: {}]
  %s2 = inlined_call_operand.vmem [shape: f32[2,2,8,16], index: 2, kind: output, shape index: {}]
  %s3 = sld [smem:[#allocation0]]
  $region41: #{trust_diffuser_net_forward.19} parent=0
    _
  %s5 = ssub.s32 1, %s3
  %s6 = scalar_select 0, %s5, %s3
  loop: start=0, step=1, limit=4
  $region2: #{trust_diffuser_net_forward.19} parent=0 // loop_pre_header
    _
  $region3: #{trust_diffuser_net_forward.19} parent=0 // loop_header
    %s8 = sphi 0, %s12
    %p9 = scmp.ge.s32.totalorder %s8, 4
    %s18 = sphi 0, %s20
    %s21 = sphi 0, %s18
    %s22 = sphi 0, %s21
    %s38 = sphi 0, %s22
    %s42 = sphi 0, %s42
    %s44 = sphi 0, %s42
    %s45 = sphi 0, %s44
    %s59 = sphi 0, %s45
    %s65 = sphi 0, %s67
    %s68 = sphi 0, %s65
    %s69 = sphi 0, %s68
    %s85 = sphi 0, %s69
  $region4: #{trust_diffuser_net_forward.19} parent=0 // loop_header_branch
    %11 = sbr.rel (%p9) target = $region8
  $region5: #{trust_diffuser_net_forward.19} parent=0 // loop_body
    %s13 = ssub.s32 %s8, 1
    %s14 = ssub.s32 %s8, 2
    %s15 = sadd.s32 %s8, 1
    %s16 = ssub.s32 %s8, %s15
    %p17 = scmp.eq.s32.totalorder %s16, 0
    %s19 = sadd.s32 %s18, 1
    %s20 = scalar_select %p17, %s18, %s19
    %p23 = pneg %p17
    %p24 = scmp.eq.s32.totalorder %s8, 1
    %p25 = por %p23, %p24
    %p26 = scmp.ne.s32.totalorder %s18, %s21
    %p27 = scmp.eq.s32.totalorder %s8, 0
    %p28 = por %p26, %p27
    %p29 = scmp.ne.s32.totalorder %s18, %s21
    %p30 = scmp.eq.s32.totalorder %s13, 1
    %p31 = por %p29, %p30
    %p32 = scmp.ne.s32.totalorder %s21, %s22
    %p33 = scmp.eq.s32.totalorder %s13, 0
    %p34 = por %p32, %p33
    %p35 = scmp.ne.s32.totalorder %s21, %s22
    %p36 = scmp.eq.s32.totalorder %s14, 1
    %p37 = por %p35, %p36
    %p39 = scmp.ne.s32.totalorder %s22, %s38
    %p40 = scmp.eq.s32.totalorder %s14, 0
    %p41 = por %p39, %p40
    %s43 = sadd.s32 %s42, 1
    %p46 = scmp.eq.s32.totalorder %s8, 1
    %p47 = scmp.ne.s32.totalorder %s42, %s44
    %p48 = scmp.eq.s32.totalorder %s8, 0
    %p49 = por %p47, %p48
    %p50 = scmp.ne.s32.totalorder %s42, %s44
    %p51 = scmp.eq.s32.totalorder %s13, 1
    %p52 = por %p50, %p51
    %p53 = scmp.ne.s32.totalorder %s44, %s45
    %p54 = scmp.eq.s32.totalorder %s13, 0
    %p55 = por %p53, %p54
    %p56 = scmp.ne.s32.totalorder %s44, %s45
    %p57 = scmp.eq.s32.totalorder %s14, 1
    %p58 = por %p56, %p57
    %p60 = scmp.ne.s32.totalorder %s45, %s59
    %p61 = scmp.eq.s32.totalorder %s14, 0
    %p62 = por %p60, %p61
    %s63 = ssub.s32 %s8, %s15
    %p64 = scmp.eq.s32.totalorder %s63, 0
    %s66 = sadd.s32 %s65, 1
    %s67 = scalar_select %p64, %s65, %s66
    %p70 = pneg %p64
    %p71 = scmp.eq.s32.totalorder %s8, 1
    %p72 = por %p70, %p71
    %p73 = scmp.ne.s32.totalorder %s65, %s68
    %p74 = scmp.eq.s32.totalorder %s8, 0
    %p75 = por %p73, %p74
    %p76 = scmp.ne.s32.totalorder %s65, %s68
    %p77 = scmp.eq.s32.totalorder %s13, 1
    %p78 = por %p76, %p77
    %p79 = scmp.ne.s32.totalorder %s68, %s69
    %p80 = scmp.eq.s32.totalorder %s13, 0
    %p81 = por %p79, %p80
    %p82 = scmp.ne.s32.totalorder %s68, %s69
    %p83 = scmp.eq.s32.totalorder %s14, 1
    %p84 = por %p82, %p83
    %p86 = scmp.ne.s32.totalorder %s69, %s85
    %p87 = scmp.eq.s32.totalorder %s14, 0
    %p88 = por %p86, %p87
    %p89 = scmp.le.s32.totalorder 1, %s8
    %p90 = scmp.lt.s32.totalorder %s8, 3
    %p91 = pnand %p89, %p90
    %p92 = pneg %p91
    // Predicated region
    $region9: #{trust_diffuser_net_forward.19} parent=5 // pred_check
      _
    $region10: #{trust_diffuser_net_forward.19} parent=5 // pred_check_branch
      %94 = sbr.rel (%p91) target = $region12
    $region11: #{trust_diffuser_net_forward.19} parent=5 // pred_region
      %s95 = ssub.s32 %s8, 1
      // Predicated region
      $region13: #{trust_diffuser_net_forward.19} parent=11 // pred_check
        %p96 = pneg %p55
      $region14: #{trust_diffuser_net_forward.19} parent=11 // pred_check_branch
        %98 = sbr.rel (%p96) target = $region16
      $region15: #{trust_diffuser_net_forward.19} parent=11 // pred_region
        _
      $region16: #{trust_diffuser_net_forward.19} parent=11 // pred_fallthru
        _
    $region12: #{trust_diffuser_net_forward.19} parent=5 // pred_fallthru
      _
    %p99 = scmp.lt.s32.totalorder %s8, 2
    // Predicated region
    $region17: #{trust_diffuser_net_forward.19} parent=5 // pred_check
      %p100 = pneg %p99
    $region18: #{trust_diffuser_net_forward.19} parent=5 // pred_check_branch
      %102 = sbr.rel (%p100) target = $region20
    $region19: #{trust_diffuser_net_forward.19} parent=5 // pred_region
      // Predicated region
      $region21: #{trust_diffuser_net_forward.19} parent=19 // pred_check
        %p103 = pneg %p28
      $region22: #{trust_diffuser_net_forward.19} parent=19 // pred_check_branch
        %105 = sbr.rel (%p103) target = $region24
      $region23: #{trust_diffuser_net_forward.19} parent=19 // pred_region
        %p106 = scmp.lt.s32.totalorder %s8, 1
        %s107 = scalar_select %p106, %s8, 1
        %s108 = smul.addr %s107, 4
        %s109 = scalar_lea.vmem %s0, %s108
      $region24: #{trust_diffuser_net_forward.19} parent=19 // pred_fallthru
        _
    $region20: #{trust_diffuser_net_forward.19} parent=5 // pred_fallthru
      _
    %p110 = scmp.le.s32.totalorder 1, %s8
    %p111 = scmp.lt.s32.totalorder %s8, 3
    %p112 = pnand %p110, %p111
    %p113 = pneg %p112
    // Predicated region
    $region25: #{trust_diffuser_net_forward.19} parent=5 // pred_check
      _
    $region26: #{trust_diffuser_net_forward.19} parent=5 // pred_check_branch
      %115 = sbr.rel (%p112) target = $region28
    $region27: #{trust_diffuser_net_forward.19} parent=5 // pred_region
      %s116 = ssub.s32 %s8, 1
      %p117 = scmp.lt.s32.totalorder %s13, 1
      %s118 = scalar_select %p117, %s13, 1
      %s119 = smul.addr %s118, 4
      %s120 = scalar_lea.vmem %s0, %s119
      %p121 = pneg %p34
      %p122 = pneg %p31
      %p123 = pneg %p55
      %p124 = pneg %p52
      %p125 = pneg %p81
      %p126 = pneg %p78
      %p127 = scmp.lt.s32.totalorder %s13, 1
      %s128 = scalar_select %p127, %s13, 1
      %s129 = smul.addr %s128, 2
      %s130 = smul.addr %s129, 8
      %s131 = scalar_lea.vmem %s2, %s130
      %p132 = scmp.lt.s32.totalorder %s13, 1
      %s133 = scalar_select %p132, %s13, 1
      %s134 = smul.addr %s133, 4
      %s135 = scalar_lea.vmem %s0, %s134
      %p136 = scmp.lt.s32.totalorder %s13, 1
      %s137 = scalar_select %p136, %s13, 1
      %s138 = smul.addr %s137, 2
      %s139 = smul.addr %s138, 8
      %s140 = scalar_lea.vmem %s2, %s139
      %v142 = vld [vmem:[%s135] sm:$0xf]
      %v143 = vld [vmem:[%s1] sm:$0xf]
      %vm144 = vcmask 130048
      %v146 = vsel %vm144, %v142, 0
      %v149 = vsel %vm144, %v143, 0
      %151 = vmatpush.bf16.xpose.msra.mxu0 0
      %152 = vmatpush.bf16.xpose.msra.mxu0 0
      %153 = vmatpush.bf16.xpose.msra.mxu0 0
      %154 = vmatpush.bf16.xpose.msra.mxu0 0
      %155 = vmatpush.bf16.xpose.msra.mxu0 0
      %156 = vmatpush.bf16.xpose.msra.mxu0 0
      %157 = vmatpush.bf16.xpose.msra.mxu0 0
      %158 = vmatpush.bf16.xpose.msra.mxu0 %v149
      %159 = vmatmul.bf16.gmra.mxu0 %v146
      %v160 = vpop.f32.mrf.mxu0
      %v161 = vadd.f32 0.0, %v160
      %v162 = vpop.f32.mrf.mxu0
      %163 = vdwg.mxu0
      %v164 = vpack.c.bf16 %v161, %v161
      %vm165 = vcmask 64512
      %v167 = vsel %vm165, %v164, 0
      %169 = vmatpush.bf16.xpose.msra.mxu0 0
      %170 = vmatpush.bf16.xpose.msra.mxu0 0
      %171 = vmatpush.bf16.xpose.msra.mxu0 0
      %172 = vmatpush.bf16.xpose.msra.mxu0 0
      %173 = vmatpush.bf16.xpose.msra.mxu0 0
      %174 = vmatpush.bf16.xpose.msra.mxu0 0
      %175 = vmatpush.bf16.xpose.msra.mxu0 0
      %176 = vmatpush.bf16.xpose.msra.mxu0 %v167
      %177 = vmatmul.bf16.gmra.mxu0 %v167
      %v178 = vpop.f32.mrf.mxu0
      %v179 = vadd.f32 0.0, %v178
      %v180 = vpop.f32.mrf.mxu0
      %181 = vdwg.mxu0
      %v182 = vpack.c.bf16 %v179, %v179
      %s183 = scalar_lea.vmem %s1, 4
      %v184 = vld [vmem:[%s183] sm:$0xf]
      %v186 = vsel %vm144, %v184, 0
      %188 = vmatpush.bf16.xpose.msra.mxu0 0
      %189 = vmatpush.bf16.xpose.msra.mxu0 0
      %190 = vmatpush.bf16.xpose.msra.mxu0 0
      %191 = vmatpush.bf16.xpose.msra.mxu0 0
      %192 = vmatpush.bf16.xpose.msra.mxu0 0
      %193 = vmatpush.bf16.xpose.msra.mxu0 0
      %194 = vmatpush.bf16.xpose.msra.mxu0 0
      %195 = vmatpush.bf16.xpose.msra.mxu0 %v186
      %196 = vmatmul.bf16.gmra.mxu0 %v146
      %v197 = vpop.f32.mrf.mxu0
      %v198 = vadd.f32 0.0, %v197
      %v199 = vpop.f32.mrf.mxu0
      %200 = vdwg.mxu0
      %v201 = vpack.c.bf16 %v198, %v198
      %v203 = vsel %vm165, %v201, 0
      %205 = vmatpush.bf16.xpose.msra.mxu0 0
      %206 = vmatpush.bf16.xpose.msra.mxu0 0
      %207 = vmatpush.bf16.xpose.msra.mxu0 0
      %208 = vmatpush.bf16.xpose.msra.mxu0 0
      %209 = vmatpush.bf16.xpose.msra.mxu0 0
      %210 = vmatpush.bf16.xpose.msra.mxu0 0
      %211 = vmatpush.bf16.xpose.msra.mxu0 0
      %212 = vmatpush.bf16.xpose.msra.mxu0 %v203
      %213 = vmatmul.bf16.gmra.mxu0 %v203
      %v214 = vpop.f32.mrf.mxu0
      %v215 = vadd.f32 0.0, %v214
      %v216 = vpop.f32.mrf.mxu0
      %217 = vdwg.mxu0
      %v218 = vpack.c.bf16 %v215, %v215
      %v220 = vunpack.c.l.b16 %v142
      %v221 = vpack.c.b16 %v220, %v220
      %222 = vrot.lane.b32.xlu0 %v221, 96
      %v223 = vpop.permute.xlu0 %222
      %v225 = vsel %vm165, %v218, 0
      %vm227 = vcmask 1043456
      %v229 = vsel %vm227, %v223, 0
      %231 = vmatpush.bf16.msra.mxu0 0
      %232 = vmatpush.bf16.msra.mxu0 0
      %233 = vmatpush.bf16.msra.mxu0 0
      %234 = vmatpush.bf16.msra.mxu0 0
      %235 = vmatpush.bf16.msra.mxu0 0
      %236 = vmatpush.bf16.msra.mxu0 0
      %237 = vmatpush.bf16.msra.mxu0 0
      %238 = vmatpush.bf16.msra.mxu0 %v229
      %239 = vmatmul.bf16.gmra.mxu0 %v225
      %v240 = vpop.f32.mrf.mxu0
      %v241 = vadd.f32 0.0, %v240
      %v242 = vpop.f32.mrf.mxu0
      %243 = vdwg.mxu0
      %v245 = vsel %vm165, %v182, 0
      %247 = vmatpush.bf16.msra.mxu0 0
      %248 = vmatpush.bf16.msra.mxu0 0
      %249 = vmatpush.bf16.msra.mxu0 0
      %250 = vmatpush.bf16.msra.mxu0 0
      %251 = vmatpush.bf16.msra.mxu0 0
      %252 = vmatpush.bf16.msra.mxu0 0
      %253 = vmatpush.bf16.msra.mxu0 0
      %254 = vmatpush.bf16.msra.mxu0 %v229
      %255 = vmatmul.bf16.gmra.mxu0 %v245
      %v256 = vpop.f32.mrf.mxu0
      %v257 = vadd.f32 %v241, %v256
      %v258 = vpop.f32.mrf.mxu0
      %259 = vdwg.mxu0
      %s260 = scalar_lea.vmem %s1, 8
      %v261 = vld [vmem:[%s260] sm:$0xf]
      %v263 = vsel %vm144, %v261, 0
      %265 = vmatpush.bf16.xpose.msra.mxu0 0
      %266 = vmatpush.bf16.xpose.msra.mxu0 0
      %267 = vmatpush.bf16.xpose.msra.mxu0 0
      %268 = vmatpush.bf16.xpose.msra.mxu0 0
      %269 = vmatpush.bf16.xpose.msra.mxu0 0
      %270 = vmatpush.bf16.xpose.msra.mxu0 0
      %271 = vmatpush.bf16.xpose.msra.mxu0 0
      %272 = vmatpush.bf16.xpose.msra.mxu0 %v263
      %273 = vmatmul.bf16.gmra.mxu0 %v146
      %v274 = vpop.f32.mrf.mxu0
      %v275 = vadd.f32 0.0, %v274
      %v276 = vpop.f32.mrf.mxu0
      %277 = vdwg.mxu0
      %v278 = vpack.c.bf16 %v275, %v275
      %v280 = vsel %vm165, %v278, 0
      %282 = vmatpush.bf16.xpose.msra.mxu0 0
      %283 = vmatpush.bf16.xpose.msra.mxu0 0
      %284 = vmatpush.bf16.xpose.msra.mxu0 0
      %285 = vmatpush.bf16.xpose.msra.mxu0 0
      %286 = vmatpush.bf16.xpose.msra.mxu0 0
      %287 = vmatpush.bf16.xpose.msra.mxu0 0
      %288 = vmatpush.bf16.xpose.msra.mxu0 0
      %289 = vmatpush.bf16.xpose.msra.mxu0 %v280
      %290 = vmatmul.bf16.gmra.mxu0 %v280
      %v291 = vpop.f32.mrf.mxu0
      %v292 = vadd.f32 0.0, %v291
      %v293 = vpop.f32.mrf.mxu0
      %294 = vdwg.mxu0
      %v295 = vpack.c.bf16 %v292, %v292
      %v297 = vsel %vm165, %v295, 0
      %299 = vmatpush.bf16.msra.mxu0 0
      %300 = vmatpush.bf16.msra.mxu0 0
      %301 = vmatpush.bf16.msra.mxu0 0
      %302 = vmatpush.bf16.msra.mxu0 0
      %303 = vmatpush.bf16.msra.mxu0 0
      %304 = vmatpush.bf16.msra.mxu0 0
      %305 = vmatpush.bf16.msra.mxu0 0
      %306 = vmatpush.bf16.msra.mxu0 %v229
      %307 = vmatmul.bf16.gmra.mxu0 %v297
      %v308 = vpop.f32.mrf.mxu0
      %v309 = vadd.f32 0.0, %v308
      %v310 = vpop.f32.mrf.mxu0
      %311 = vdwg.mxu0
      %v312 = vadd.f32 %v257, %v309
      %s313 = scalar_lea.vmem %s1, 12
      %v314 = vld [vmem:[%s313] sm:$0xf]
      %v316 = vsel %vm144, %v314, 0
      %318 = vmatpush.bf16.xpose.msra.mxu0 0
      %319 = vmatpush.bf16.xpose.msra.mxu0 0
      %320 = vmatpush.bf16.xpose.msra.mxu0 0
      %321 = vmatpush.bf16.xpose.msra.mxu0 0
      %322 = vmatpush.bf16.xpose.msra.mxu0 0
      %323 = vmatpush.bf16.xpose.msra.mxu0 0
      %324 = vmatpush.bf16.xpose.msra.mxu0 0
      %325 = vmatpush.bf16.xpose.msra.mxu0 %v316
      %326 = vmatmul.bf16.gmra.mxu0 %v146
      %v327 = vpop.f32.mrf.mxu0
      %v328 = vadd.f32 0.0, %v327
      %v329 = vpop.f32.mrf.mxu0
      %330 = vdwg.mxu0
      %v331 = vpack.c.bf16 %v328, %v328
      %v333 = vsel %vm165, %v331, 0
      %335 = vmatpush.bf16.xpose.msra.mxu0 0
      %336 = vmatpush.bf16.xpose.msra.mxu0 0
      %337 = vmatpush.bf16.xpose.msra.mxu0 0
      %338 = vmatpush.bf16.xpose.msra.mxu0 0
      %339 = vmatpush.bf16.xpose.msra.mxu0 0
      %340 = vmatpush.bf16.xpose.msra.mxu0 0
      %341 = vmatpush.bf16.xpose.msra.mxu0 0
      %342 = vmatpush.bf16.xpose.msra.mxu0 %v333
      %343 = vmatmul.bf16.gmra.mxu0 %v333
      %v344 = vpop.f32.mrf.mxu0
      %v345 = vadd.f32 0.0, %v344
      %v346 = vpop.f32.mrf.mxu0
      %347 = vdwg.mxu0
      %v348 = vpack.c.bf16 %v345, %v345
      %v350 = vsel %vm165, %v348, 0
      %352 = vmatpush.bf16.msra.mxu0 0
      %353 = vmatpush.bf16.msra.mxu0 0
      %354 = vmatpush.bf16.msra.mxu0 0
      %355 = vmatpush.bf16.msra.mxu0 0
      %356 = vmatpush.bf16.msra.mxu0 0
      %357 = vmatpush.bf16.msra.mxu0 0
      %358 = vmatpush.bf16.msra.mxu0 0
      %359 = vmatpush.bf16.msra.mxu0 %v229
      %360 = vmatmul.bf16.gmra.mxu0 %v350
      %v361 = vpop.f32.mrf.mxu0
      %v362 = vadd.f32 0.0, %v361
      %v363 = vpop.f32.mrf.mxu0
      %364 = vdwg.mxu0
      %v365 = vadd.f32 %v312, %v362
      %366 = vst.msk [vmem:[%s140] sm:$0xff] %vm144, %v365
      %v367 = vld [vmem:[%s135] sm:$0xf]
      %v368 = vld [vmem:[%s1] sm:$0xf]
      %v370 = vunpack.c.l.b16 %v367
      %v371 = vpack.c.b16 %v370, %v370
      %372 = vrot.lane.b32.xlu0 %v371, 112
      %v373 = vpop.permute.xlu0 %372
      %v375 = vunpack.c.l.b16 %v368
      %v376 = vpack.c.b16 %v375, %v375
      %377 = vrot.lane.b32.xlu0 %v376, 112
      %v378 = vpop.permute.xlu0 %377
      %v380 = vsel %vm144, %v373, 0
      %v383 = vsel %vm144, %v378, 0
      %385 = vmatpush.bf16.xpose.msra.mxu0 0
      %386 = vmatpush.bf16.xpose.msra.mxu0 0
      %387 = vmatpush.bf16.xpose.msra.mxu0 0
      %388 = vmatpush.bf16.xpose.msra.mxu0 0
      %389 = vmatpush.bf16.xpose.msra.mxu0 0
      %390 = vmatpush.bf16.xpose.msra.mxu0 0
      %391 = vmatpush.bf16.xpose.msra.mxu0 0
      %392 = vmatpush.bf16.xpose.msra.mxu0 %v383
      %393 = vmatmul.bf16.gmra.mxu0 %v380
      %v394 = vpop.f32.mrf.mxu0
      %v395 = vadd.f32 0.0, %v394
      %v396 = vpop.f32.mrf.mxu0
      %397 = vdwg.mxu0
      %v398 = vpack.c.bf16 %v395, %v395
      %v400 = vsel %vm165, %v398, 0
      %402 = vmatpush.bf16.xpose.msra.mxu0 0
      %403 = vmatpush.bf16.xpose.msra.mxu0 0
      %404 = vmatpush.bf16.xpose.msra.mxu0 0
      %405 = vmatpush.bf16.xpose.msra.mxu0 0
      %406 = vmatpush.bf16.xpose.msra.mxu0 0
      %407 = vmatpush.bf16.xpose.msra.mxu0 0
      %408 = vmatpush.bf16.xpose.msra.mxu0 0
      %409 = vmatpush.bf16.xpose.msra.mxu0 %v400
      %410 = vmatmul.bf16.gmra.mxu0 %v400
      %v411 = vpop.f32.mrf.mxu0
      %v412 = vadd.f32 0.0, %v411
      %v413 = vpop.f32.mrf.mxu0
      %414 = vdwg.mxu0
      %v415 = vpack.c.bf16 %v412, %v412
      %v416 = vld [vmem:[%s183] sm:$0xf]
      %v418 = vunpack.c.l.b16 %v416
      %v419 = vpack.c.b16 %v418, %v418
      %420 = vrot.lane.b32.xlu0 %v419, 112
      %v421 = vpop.permute.xlu0 %420
      %v423 = vsel %vm144, %v421, 0
      %425 = vmatpush.bf16.xpose.msra.mxu0 0
      %426 = vmatpush.bf16.xpose.msra.mxu0 0
      %427 = vmatpush.bf16.xpose.msra.mxu0 0
      %428 = vmatpush.bf16.xpose.msra.mxu0 0
      %429 = vmatpush.bf16.xpose.msra.mxu0 0
      %430 = vmatpush.bf16.xpose.msra.mxu0 0
      %431 = vmatpush.bf16.xpose.msra.mxu0 0
      %432 = vmatpush.bf16.xpose.msra.mxu0 %v423
      %433 = vmatmul.bf16.gmra.mxu0 %v380
      %v434 = vpop.f32.mrf.mxu0
      %v435 = vadd.f32 0.0, %v434
      %v436 = vpop.f32.mrf.mxu0
      %437 = vdwg.mxu0
      %v438 = vpack.c.bf16 %v435, %v435
      %v440 = vsel %vm165, %v438, 0
      %442 = vmatpush.bf16.xpose.msra.mxu0 0
      %443 = vmatpush.bf16.xpose.msra.mxu0 0
      %444 = vmatpush.bf16.xpose.msra.mxu0 0
      %445 = vmatpush.bf16.xpose.msra.mxu0 0
      %446 = vmatpush.bf16.xpose.msra.mxu0 0
      %447 = vmatpush.bf16.xpose.msra.mxu0 0
      %448 = vmatpush.bf16.xpose.msra.mxu0 0
      %449 = vmatpush.bf16.xpose.msra.mxu0 %v440
      %450 = vmatmul.bf16.gmra.mxu0 %v440
      %v451 = vpop.f32.mrf.mxu0
      %v452 = vadd.f32 0.0, %v451
      %v453 = vpop.f32.mrf.mxu0
      %454 = vdwg.mxu0
      %v455 = vpack.c.bf16 %v452, %v452
      %456 = vrot.lane.b32.xlu0 %v371, 80
      %v457 = vpop.permute.xlu0 %456
      %v459 = vsel %vm165, %v455, 0
      %v462 = vsel %vm227, %v457, 0
      %464 = vmatpush.bf16.msra.mxu0 0
      %465 = vmatpush.bf16.msra.mxu0 0
      %466 = vmatpush.bf16.msra.mxu0 0
      %467 = vmatpush.bf16.msra.mxu0 0
      %468 = vmatpush.bf16.msra.mxu0 0
      %469 = vmatpush.bf16.msra.mxu0 0
      %470 = vmatpush.bf16.msra.mxu0 0
      %471 = vmatpush.bf16.msra.mxu0 %v462
      %472 = vmatmul.bf16.gmra.mxu0 %v459
      %v473 = vpop.f32.mrf.mxu0
      %v474 = vadd.f32 0.0, %v473
      %v475 = vpop.f32.mrf.mxu0
      %476 = vdwg.mxu0
      %v478 = vsel %vm165, %v415, 0
      %480 = vmatpush.bf16.msra.mxu0 0
      %481 = vmatpush.bf16.msra.mxu0 0
      %482 = vmatpush.bf16.msra.mxu0 0
      %483 = vmatpush.bf16.msra.mxu0 0
      %484 = vmatpush.bf16.msra.mxu0 0
      %485 = vmatpush.bf16.msra.mxu0 0
      %486 = vmatpush.bf16.msra.mxu0 0
      %487 = vmatpush.bf16.msra.mxu0 %v462
      %488 = vmatmul.bf16.gmra.mxu0 %v478
      %v489 = vpop.f32.mrf.mxu0
      %v490 = vadd.f32 %v474, %v489
      %v491 = vpop.f32.mrf.mxu0
      %492 = vdwg.mxu0
      %v493 = vld [vmem:[%s260] sm:$0xf]
      %v495 = vunpack.c.l.b16 %v493
      %v496 = vpack.c.b16 %v495, %v495
      %497 = vrot.lane.b32.xlu0 %v496, 112
      %v498 = vpop.permute.xlu0 %497
      %v500 = vsel %vm144, %v498, 0
      %502 = vmatpush.bf16.xpose.msra.mxu0 0
      %503 = vmatpush.bf16.xpose.msra.mxu0 0
      %504 = vmatpush.bf16.xpose.msra.mxu0 0
      %505 = vmatpush.bf16.xpose.msra.mxu0 0
      %506 = vmatpush.bf16.xpose.msra.mxu0 0
      %507 = vmatpush.bf16.xpose.msra.mxu0 0
      %508 = vmatpush.bf16.xpose.msra.mxu0 0
      %509 = vmatpush.bf16.xpose.msra.mxu0 %v500
      %510 = vmatmul.bf16.gmra.mxu0 %v380
      %v511 = vpop.f32.mrf.mxu0
      %v512 = vadd.f32 0.0, %v511
      %v513 = vpop.f32.mrf.mxu0
      %514 = vdwg.mxu0
      %v515 = vpack.c.bf16 %v512, %v512
      %v517 = vsel %vm165, %v515, 0
      %519 = vmatpush.bf16.xpose.msra.mxu0 0
      %520 = vmatpush.bf16.xpose.msra.mxu0 0
      %521 = vmatpush.bf16.xpose.msra.mxu0 0
      %522 = vmatpush.bf16.xpose.msra.mxu0 0
      %523 = vmatpush.bf16.xpose.msra.mxu0 0
      %524 = vmatpush.bf16.xpose.msra.mxu0 0
      %525 = vmatpush.bf16.xpose.msra.mxu0 0
      %526 = vmatpush.bf16.xpose.msra.mxu0 %v517
      %527 = vmatmul.bf16.gmra.mxu0 %v517
      %v528 = vpop.f32.mrf.mxu0
      %v529 = vadd.f32 0.0, %v528
      %v530 = vpop.f32.mrf.mxu0
      %531 = vdwg.mxu0
      %v532 = vpack.c.bf16 %v529, %v529
      %v534 = vsel %vm165, %v532, 0
      %536 = vmatpush.bf16.msra.mxu0 0
      %537 = vmatpush.bf16.msra.mxu0 0
      %538 = vmatpush.bf16.msra.mxu0 0
      %539 = vmatpush.bf16.msra.mxu0 0
      %540 = vmatpush.bf16.msra.mxu0 0
      %541 = vmatpush.bf16.msra.mxu0 0
      %542 = vmatpush.bf16.msra.mxu0 0
      %543 = vmatpush.bf16.msra.mxu0 %v462
      %544 = vmatmul.bf16.gmra.mxu0 %v534
      %v545 = vpop.f32.mrf.mxu0
      %v546 = vadd.f32 0.0, %v545
      %v547 = vpop.f32.mrf.mxu0
      %548 = vdwg.mxu0
      %v549 = vadd.f32 %v490, %v546
      %v550 = vld [vmem:[%s313] sm:$0xf]
      %v552 = vunpack.c.l.b16 %v550
      %v553 = vpack.c.b16 %v552, %v552
      %554 = vrot.lane.b32.xlu0 %v553, 112
      %v555 = vpop.permute.xlu0 %554
      %v557 = vsel %vm144, %v555, 0
      %559 = vmatpush.bf16.xpose.msra.mxu0 0
      %560 = vmatpush.bf16.xpose.msra.mxu0 0
      %561 = vmatpush.bf16.xpose.msra.mxu0 0
      %562 = vmatpush.bf16.xpose.msra.mxu0 0
      %563 = vmatpush.bf16.xpose.msra.mxu0 0
      %564 = vmatpush.bf16.xpose.msra.mxu0 0
      %565 = vmatpush.bf16.xpose.msra.mxu0 0
      %566 = vmatpush.bf16.xpose.msra.mxu0 %v557
      %567 = vmatmul.bf16.gmra.mxu0 %v380
      %v568 = vpop.f32.mrf.mxu0
      %v569 = vadd.f32 0.0, %v568
      %v570 = vpop.f32.mrf.mxu0
      %571 = vdwg.mxu0
      %v572 = vpack.c.bf16 %v569, %v569
      %v574 = vsel %vm165, %v572, 0
      %576 = vmatpush.bf16.xpose.msra.mxu0 0
      %577 = vmatpush.bf16.xpose.msra.mxu0 0
      %578 = vmatpush.bf16.xpose.msra.mxu0 0
      %579 = vmatpush.bf16.xpose.msra.mxu0 0
      %580 = vmatpush.bf16.xpose.msra.mxu0 0
      %581 = vmatpush.bf16.xpose.msra.mxu0 0
      %582 = vmatpush.bf16.xpose.msra.mxu0 0
      %583 = vmatpush.bf16.xpose.msra.mxu0 %v574
      %584 = vmatmul.bf16.gmra.mxu0 %v574
      %v585 = vpop.f32.mrf.mxu0
      %v586 = vadd.f32 0.0, %v585
      %v587 = vpop.f32.mrf.mxu0
      %588 = vdwg.mxu0
      %v589 = vpack.c.bf16 %v586, %v586
      %v591 = vsel %vm165, %v589, 0
      %593 = vmatpush.bf16.msra.mxu0 0
      %594 = vmatpush.bf16.msra.mxu0 0
      %595 = vmatpush.bf16.msra.mxu0 0
      %596 = vmatpush.bf16.msra.mxu0 0
      %597 = vmatpush.bf16.msra.mxu0 0
      %598 = vmatpush.bf16.msra.mxu0 0
      %599 = vmatpush.bf16.msra.mxu0 0
      %600 = vmatpush.bf16.msra.mxu0 %v462
      %601 = vmatmul.bf16.gmra.mxu0 %v591
      %v602 = vpop.f32.mrf.mxu0
      %v603 = vadd.f32 0.0, %v602
      %v604 = vpop.f32.mrf.mxu0
      %605 = vdwg.mxu0
      %v606 = vadd.f32 %v549, %v603
      %s607 = scalar_lea.vmem %s140, 8
      %608 = vst.msk [vmem:[%s607] sm:$0xff] %vm144, %v606
      %p609 = scmp.lt.s32.totalorder %s13, 1
      %s610 = scalar_select %p609, %s13, 1
      %s611 = smul.addr %s610, 2
      %s612 = smul.addr %s611, 8
      %s613 = scalar_lea.vmem %s2, %s612
      // Predicated region
      $region29: #{trust_diffuser_net_forward.19} parent=27 // pred_check
        %p614 = pneg %p78
      $region30: #{trust_diffuser_net_forward.19} parent=27 // pred_check_branch
        %616 = sbr.rel (%p614) target = $region32
      $region31: #{trust_diffuser_net_forward.19} parent=27 // pred_region
        _
      $region32: #{trust_diffuser_net_forward.19} parent=27 // pred_fallthru
        _
    $region28: #{trust_diffuser_net_forward.19} parent=5 // pred_fallthru
      _
    %p617 = scmp.le.s32.totalorder 2, %s8
    // Predicated region
    $region33: #{trust_diffuser_net_forward.19} parent=5 // pred_check
      %p618 = pneg %p617
    $region34: #{trust_diffuser_net_forward.19} parent=5 // pred_check_branch
      %620 = sbr.rel (%p618) target = $region36
    $region35: #{trust_diffuser_net_forward.19} parent=5 // pred_region
      %s621 = ssub.s32 %s8, 2
      // Predicated region
      $region37: #{trust_diffuser_net_forward.19} parent=35 // pred_check
        %p622 = pneg %p84
      $region38: #{trust_diffuser_net_forward.19} parent=35 // pred_check_branch
        %624 = sbr.rel (%p622) target = $region40
      $region39: #{trust_diffuser_net_forward.19} parent=35 // pred_region
        %p625 = scmp.lt.s32.totalorder %s14, 1
        %s626 = scalar_select %p625, %s14, 1
        %s627 = smul.addr %s626, 2
        %s628 = smul.addr %s627, 8
        %s629 = scalar_lea.vmem %s2, %s628
      $region40: #{trust_diffuser_net_forward.19} parent=35 // pred_fallthru
        _
    $region36: #{trust_diffuser_net_forward.19} parent=5 // pred_fallthru
      _
  $region6: #{trust_diffuser_net_forward.19} parent=0 // loop_footer
    %s12 = sadd.s32 1, %s8
  $region7: #{trust_diffuser_net_forward.19} parent=0 // loop_footer_branch
    %7 = sbr.rel target = $region3
  $region8: #{trust_diffuser_net_forward.19} parent=0 // loop_exit
    _

// kernel: trust_diffuser_net_forward.27
$region0: #{trust_diffuser_net_forward.27}
  #allocation0 [shape = 'u32[]', space=smem, size = 0x4, offset = 0x4, fixed_abs, tag = 'smem constant byte address 0x4 - core index']
  #allocation1 [shape = 'u32[72,128]{1,0:T(1,128)}', space=vmem, size = 0x9000, scoped, tag = 'internal scratch']
  %s0 = inlined_call_operand.vmem [shape: f32[16,32], index: 0, kind: input, shape index: {}]
  %s1 = inlined_call_operand.vmem [shape: f32[16,32], index: 1, kind: input, shape index: {}]
  %s2 = inlined_call_operand.vmem [shape: f32[16,1], index: 2, kind: input, shape index: {}]
  %s3 = inlined_call_operand.vmem [shape: bf16[32,8], index: 3, kind: input, shape index: {}]
  %s4 = inlined_call_operand.vmem [shape: f32[1,8], index: 4, kind: input, shape index: {}]
  %s5 = inlined_call_operand.vmem [shape: bf16[8,4], index: 5, kind: input, shape index: {}]
  %s6 = inlined_call_operand.vmem [shape: f32[1,4], index: 6, kind: input, shape index: {}]
  %s7 = inlined_call_operand.vmem [shape: f32[16,32], index: 7, kind: output, shape index: {0}]
  %s8 = inlined_call_operand.vmem [shape: f32[16,4], index: 8, kind: output, shape index: {1}]
  %9 = xla_tuple %s7, %s8
  %s10 = sld [smem:[#allocation0]]
  $region46: #{trust_diffuser_net_forward.27} parent=0
    _
  %s12 = ssub.s32 1, %s10
  %s13 = scalar_select 0, %s12, %s10
  // Predicated region
  $region2: #{trust_diffuser_net_forward.27} parent=0 // pred_check
    _
  $region3: #{trust_diffuser_net_forward.27} parent=0 // pred_check_branch
    %15 = sbr.rel (0) target = $region5
  $region4: #{trust_diffuser_net_forward.27} parent=0 // pred_region
    _
  $region5: #{trust_diffuser_net_forward.27} parent=0 // pred_fallthru
    _
  // Predicated region
  $region6: #{trust_diffuser_net_forward.27} parent=0 // pred_check
    _
  $region7: #{trust_diffuser_net_forward.27} parent=0 // pred_check_branch
    %17 = sbr.rel (0) target = $region9
  $region8: #{trust_diffuser_net_forward.27} parent=0 // pred_region
    _
  $region9: #{trust_diffuser_net_forward.27} parent=0 // pred_fallthru
    _
  // Predicated region
  $region10: #{trust_diffuser_net_forward.27} parent=0 // pred_check
    _
  $region11: #{trust_diffuser_net_forward.27} parent=0 // pred_check_branch
    %19 = sbr.rel (0) target = $region13
  $region12: #{trust_diffuser_net_forward.27} parent=0 // pred_region
    _
  $region13: #{trust_diffuser_net_forward.27} parent=0 // pred_fallthru
    _
  // Predicated region
  $region14: #{trust_diffuser_net_forward.27} parent=0 // pred_check
    _
  $region15: #{trust_diffuser_net_forward.27} parent=0 // pred_check_branch
    %21 = sbr.rel (0) target = $region17
  $region16: #{trust_diffuser_net_forward.27} parent=0 // pred_region
    _
  $region17: #{trust_diffuser_net_forward.27} parent=0 // pred_fallthru
    _
  // Predicated region
  $region18: #{trust_diffuser_net_forward.27} parent=0 // pred_check
    _
  $region19: #{trust_diffuser_net_forward.27} parent=0 // pred_check_branch
    %23 = sbr.rel (0) target = $region21
  $region20: #{trust_diffuser_net_forward.27} parent=0 // pred_region
    _
  $region21: #{trust_diffuser_net_forward.27} parent=0 // pred_fallthru
    _
  // Predicated region
  $region22: #{trust_diffuser_net_forward.27} parent=0 // pred_check
    _
  $region23: #{trust_diffuser_net_forward.27} parent=0 // pred_check_branch
    %25 = sbr.rel (0) target = $region25
  $region24: #{trust_diffuser_net_forward.27} parent=0 // pred_region
    _
  $region25: #{trust_diffuser_net_forward.27} parent=0 // pred_fallthru
    _
  // Predicated region
  $region26: #{trust_diffuser_net_forward.27} parent=0 // pred_check
    _
  $region27: #{trust_diffuser_net_forward.27} parent=0 // pred_check_branch
    %27 = sbr.rel (0) target = $region29
  $region28: #{trust_diffuser_net_forward.27} parent=0 // pred_region
    _
  $region29: #{trust_diffuser_net_forward.27} parent=0 // pred_fallthru
    _
  %v29 = vld [vmem:[%s2] sm:$0xff]
  %v30 = vld [vmem:[%s2 + $0x8] sm:$0xff]
  %v31 = vld [vmem:[%s1] sm:$0xff]
  %v32 = vld [vmem:[%s1 + $0x8] sm:$0xff]
  %34 = vset.pattern.permute.xlu0 0
  %35 = vperm.xlu0 %34, %v29
  %v36 = vpop.permute.xlu0 %35
  %39 = vset.pattern.permute.xlu0 0
  %40 = vperm.xlu0 %39, %v30
  %v41 = vpop.permute.xlu0 %40
  %v43 = vmul.f32 %v36, %v31
  %v44 = vmul.f32 %v41, %v32
  %v45 = vsub.f32 1.0, %v29
  %v46 = vsub.f32 1.0, %v30
  %v47 = vld [vmem:[%s0] sm:$0xff]
  %v48 = vld [vmem:[%s0 + $0x8] sm:$0xff]
  %50 = vset.pattern.permute.xlu0 0
  %51 = vperm.xlu0 %50, %v45
  %v52 = vpop.permute.xlu0 %51
  %55 = vset.pattern.permute.xlu0 0
  %56 = vperm.xlu0 %55, %v46
  %v57 = vpop.permute.xlu0 %56
  %v59 = vmul.f32 %v52, %v47
  %v60 = vmul.f32 %v57, %v48
  %v61 = vadd.f32 %v43, %v59
  %v62 = vadd.f32 %v44, %v60
  %vm63 = vcmask 261120
  %64 = vst.msk [vmem:[%s7] sm:$0xff] %vm63, %v61
  %65 = vst.msk [vmem:[%s7 + $0x8] sm:$0xff] %vm63, %v62
  %v66 = vpack.c.bf16 %v62, %v61
  %v67 = vld [vmem:[%s3] sm:$0xf]
  %v68 = vld [vmem:[%s3 + $0x4] sm:$0xf]
  %v69 = vld [vmem:[%s3 + $0x8] sm:$0xf]
  %v70 = vld [vmem:[%s3 + $0xc] sm:$0xf]
  %v71 = vld [vmem:[%s4] sm:$0x1]
  %v73 = vperm.slane %v71, 0
  %v79 = vunpack.c.l.b16 %v67
  %v80 = vunpack.c.l.b16 %v68
  %v81 = vunpack.c.l.b16 %v69
  %v82 = vunpack.c.l.b16 %v70
  %v83 = vpack.c.b16 %v80, %v79
  %v84 = vpack.c.b16 %v82, %v81
  %v88 = vsel %vm63, %v66, 0
  %90 = vmatpush.bf16.msra.mxu0 0
  %91 = vmatpush.bf16.msra.mxu0 0
  %92 = vmatpush.bf16.msra.mxu0 0
  %93 = vmatpush.bf16.msra.mxu0 0
  %94 = vmatpush.bf16.msra.mxu0 0
  %95 = vmatpush.bf16.msra.mxu0 0
  %96 = vmatpush.bf16.msra.mxu0 %v84
  %97 = vmatpush.bf16.msra.mxu0 %v83
  %98 = vmatmul.bf16.gmra.mxu0 %v88
  %v99 = vpop.f32.mrf.mxu0
  %v100 = vadd.f32 %v73, %v99
  %v101 = vpop.f32.mrf.mxu0
  %v102 = vadd.f32 %v73, %v101
  %103 = vdwg.mxu0
  %v104 = vmul.f32 %v100, 0.5
  %v105 = vmul.f32 %v102, 0.5
  %v106 = vmul.f32 %v100, 0.044715
  %v107 = vmul.f32 %v102, 0.044715
  %v108 = vmul.f32 %v106, %v100
  %v109 = vmul.f32 %v107, %v102
  %v110 = vmul.f32 %v108, %v100
  %v111 = vmul.f32 %v109, %v102
  %v112 = vadd.f32 %v100, %v110
  %v113 = vadd.f32 %v102, %v111
  %v114 = vmul.f32 %v112, 0.7978846
  %v115 = vmul.f32 %v113, 0.7978846
  %v116 = vtanh.pop %v114
  %v117 = vtanh.pop %v115
  %v118 = vadd.f32 %v116, 1.0
  %v119 = vadd.f32 %v117, 1.0
  %v120 = vmul.f32 %v104, %v118
  %v121 = vmul.f32 %v105, %v119
  %v122 = vpack.c.bf16 %v121, %v120
  %v123 = vld [vmem:[%s5] sm:$0xf]
  %v124 = vld [vmem:[%s6] sm:$0x1]
  %v126 = vperm.slane %v124, 0
  %vm128 = vcmask 64512
  %v130 = vsel %vm128, %v122, 0
  %vm132 = vcmask 1043456
  %v134 = vsel %vm132, %v123, 0
  %136 = vmatpush.bf16.msra.mxu0 0
  %137 = vmatpush.bf16.msra.mxu0 0
  %138 = vmatpush.bf16.msra.mxu0 0
  %139 = vmatpush.bf16.msra.mxu0 0
  %140 = vmatpush.bf16.msra.mxu0 0
  %141 = vmatpush.bf16.msra.mxu0 0
  %142 = vmatpush.bf16.msra.mxu0 0
  %143 = vmatpush.bf16.msra.mxu0 %v134
  %144 = vmatmul.bf16.gmra.mxu0 %v130
  %v145 = vpop.f32.mrf.mxu0
  %v146 = vadd.f32 %v126, %v145
  %v147 = vpop.f32.mrf.mxu0
  %v148 = vadd.f32 %v126, %v147
  %149 = vdwg.mxu0
  %vm150 = vcmask 31744
  %151 = vst.msk [vmem:[%s8] sm:$0xff] %vm150, %v146
  %152 = vst.msk [vmem:[%s8 + $0x8] sm:$0xff] %vm150, %v148
  // Predicated region
  $region30: #{trust_diffuser_net_forward.27} parent=0 // pred_check
    _
  $region31: #{trust_diffuser_net_forward.27} parent=0 // pred_check_branch
    %154 = sbr.rel (0) target = $region33
  $region32: #{trust_diffuser_net_forward.27} parent=0 // pred_region
    _
  $region33: #{trust_diffuser_net_forward.27} parent=0 // pred_fallthru
    _
  // Predicated region
  $region34: #{trust_diffuser_net_forward.27} parent=0 // pred_check
    _
  $region35: #{trust_diffuser_net_forward.27} parent=0 // pred_check_branch
    %156 = sbr.rel (0) target = $region37
  $region36: #{trust_diffuser_net_forward.27} parent=0 // pred_region
    _
  $region37: #{trust_diffuser_net_forward.27} parent=0 // pred_fallthru
    _
  // Predicated region
  $region38: #{trust_diffuser_net_forward.27} parent=0 // pred_check
    _
  $region39: #{trust_diffuser_net_forward.27} parent=0 // pred_check_branch
    %158 = sbr.rel (0) target = $region41
  $region40: #{trust_diffuser_net_forward.27} parent=0 // pred_region
    _
  $region41: #{trust_diffuser_net_forward.27} parent=0 // pred_fallthru
    _
  // Predicated region
  $region42: #{trust_diffuser_net_forward.27} parent=0 // pred_check
    _
  $region43: #{trust_diffuser_net_forward.27} parent=0 // pred_check_branch
    %160 = sbr.rel (0) target = $region45
  $region44: #{trust_diffuser_net_forward.27} parent=0 // pred_region
    _
  $region45: #{trust_diffuser_net_forward.27} parent=0 // pred_fallthru
    _

</llo_original>
